<compile_context>
chip_gen: v5e
topology: v5e:2x2
jax: 0.10.0
libtpu: 0.0.40
codegen_flags: <defaults>
</compile_context>

<pallas_src>
import functools

import jax
import jax.numpy as jnp
from jax.experimental import pallas as pl
from jax.experimental.pallas import tpu as pltpu


def _round_up(v, m):
    return (v + m - 1) // m * m


def _vmem_phys_bytes():
    try:
        info = pltpu.get_tpu_info()
        return int(getattr(info, "vmem_capacity_bytes", 128 * 1024 * 1024))
    except Exception:
        return 128 * 1024 * 1024


def _num_tensorcores():
    # v7x has 2 TensorCores per chip; v5e/v6e have 1.
    try:
        kind = (getattr(jax.devices()[0], "device_kind", "") or "").lower()
        if "v7" in kind:
            return 2
    except Exception:
        pass
    return 1


def _resident_footprint(Bb, N, F1, Cp, T, TP):
    adj_in = 2 * Bb * N * N * 2                     # double-buffered bf16 adj block
    x_in = 2 * Bb * N * F1 * 2
    outs = 2 * Bb * T * (Cp + TP) * 4
    live = Bb * N * (F1 + Cp + 2 * T) * 4 + Bb * T * N * 4
    weights = (2 * F1 * Cp + Cp * T + T * TP + T) * 4
    return adj_in + x_in + outs + live + weights


def _tiled_footprint(Bb, Nk, N, F1, Cp, T, TP):
    adj_in = 2 * Bb * Nk * N * 2                    # double-buffered bf16 adj row chunk
    x_in = 2 * Bb * N * F1 * 2
    outs = 2 * Bb * T * (Cp + TP) * 4
    scratch = Bb * (N * (F1 + T) + T * T) * 4       # agg, s, adj_pool accumulator
    finalize = Bb * N * (Cp + 2 * T) * 4            # h / logits live only in the finalize step
    weights = (2 * F1 * Cp + Cp * T + T * TP + T) * 4
    return adj_in + x_in + outs + scratch + finalize + weights


def _pick_schedule(B, N, F1, Cp, T, TP, budget, cores, block_batch, node_block):
    """Choose (batch block, node chunk); node chunk is None => resident (whole-N) kernel."""
    b_divs = [block_batch] if block_batch is not None else \
        [d for d in range(B, 0, -1) if B % d == 0]
    n_divs = [node_block] if node_block is not None else \
        [d for d in range(N, 0, -1) if N % d == 0 and (d % 8 == 0 or d == N)]

    def ordered(divs):
        if cores < 2:
            return divs                              # single TC: fewest grid steps wins
        # 2 TCs (v7x): prefer the largest Bb whose step count splits evenly across cores.
        even = [d for d in divs if (B // d) >= 2 and (B // d) % 2 == 0]
        multi = [d for d in divs if (B // d) >= 2 and d not in even]
        rest = [d for d in divs if d not in even and d not in multi]
        return even + multi + rest

    if node_block is None:
        for d in ordered(b_divs):
            if _resident_footprint(d, N, F1, Cp, T, TP) <= budget:
                return d, None
    for d in ordered(b_divs):
        for nk in n_divs:
            if _tiled_footprint(d, nk, N, F1, Cp, T, TP) <= budget:
                return d, nk
    return b_divs[-1], n_divs[-1]                    # best effort (smallest blocks)


# --------------------------------------------------------------------------------------
# Kernel A: adj resident per batch block (single pass over adj).
# --------------------------------------------------------------------------------------
def _diffpool_kernel_resident(x_ref, adj_ref, w_rel_ref, w_root_ref, w_assign_ref,
                              b_assign_ref, pad_eye_ref, xpool_ref, adjpool_ref):
    dn = jax.lax.dot_general
    f32 = jnp.float32

    x_aug = x_ref[...]                 # (Bb, N, F1) bf16, last column == 1
    adj = adj_ref[...]                 # (Bb, N, N)  bf16 {0,1}; never up-cast

    # agg = adj @ [x | 1]  (bf16 x bf16 -> f32); last column is the exact degree.
    agg = dn(adj, x_aug, (((2,), (1,)), ((0,), (0,))), preferred_element_type=f32)
    deg = jnp.maximum(agg[:, :, -1:], 1.0)                     # clamp(min=1)
    agg = agg * pl.reciprocal(deg, approx=True)                # EUP divide

    # W_rel_ext has a zero last row; W_root_ext's last row is b_sage (ones column).
    h = (dn(agg, w_rel_ref[...], (((2,), (0,)), ((), ())), preferred_element_type=f32)
         + dn(x_aug.astype(f32), w_root_ref[...], (((2,), (0,)), ((), ())),
              preferred_element_type=f32))
    h = jnp.maximum(h, 0.0)                                    # (Bb, N, Cp); pad cols == 0

    logits = dn(h, w_assign_ref[...], (((2,), (0,)), ((), ())),
                preferred_element_type=f32) + b_assign_ref[...]
    e0 = jnp.exp(logits - jnp.max(logits, axis=1, keepdims=True))
    s = e0 / jnp.sum(e0, axis=1, keepdims=True)                # softmax over nodes (dim=1)
    e1 = jnp.exp(s - jnp.max(s, axis=-1, keepdims=True))
    s = e1 / jnp.sum(e1, axis=-1, keepdims=True)               # softmax over clusters

    # Pooling: contract the node axis of s directly (no explicit transpose).
    xpool_ref[...] = dn(s, h, (((1,), (1,)), ((0,), (0,))),
                        preferred_element_type=f32)            # (Bb, T, Cp) lane-dense
    tmp = dn(s.astype(jnp.bfloat16), adj, (((1,), (1,)), ((0,), (0,))),
             preferred_element_type=f32)                       # (Bb, T, N) bf16 x bf16
    ap = dn(tmp, s, (((2,), (1,)), ((0,), (0,))),
            preferred_element_type=f32)                        # (Bb, T, T); f32 s here
    adjpool_ref[...] = dn(ap, pad_eye_ref[...], (((2,), (0,)), ((), ())),
                          preferred_element_type=f32)          # lane-pad T -> TP


# --------------------------------------------------------------------------------------
# Kernel B: node-tiled two-phase pipeline (adj streamed in (Bb, Nk, N) row chunks).
#   phase 0: agg rows per chunk; at the last chunk compute h, s, x_pool, zero adj_pool acc
#   phase 1: accumulate s_chunk^T @ adj_chunk @ s; at the last chunk write adj_pool
# --------------------------------------------------------------------------------------
def _diffpool_kernel_tiled(x_ref, adj_ref, w_rel_ref, w_root_ref, w_assign_ref,
                           b_assign_ref, pad_eye_ref, xpool_ref, adjpool_ref,
                           agg_ref, s_ref, ap_ref, *, node_block):
    dn = jax.lax.dot_general
    f32 = jnp.float32
    phase = pl.program_id(1)
    k = pl.program_id(2)
    k_last = pl.num_programs(2) - 1
    row0 = pl.multiple_of(k * node_block, node_block)

    @pl.when(phase == 0)
    def _aggregate_rows():
        # (Bb, Nk, N) bf16 @ (Bb, N, F1) bf16 -> (Bb, Nk, F1) f32; last col = degree
        agg_rows = dn(adj_ref[...], x_ref[...], (((2,), (1,)), ((0,), (0,))),
                      preferred_element_type=f32)
        agg_ref[:, pl.ds(row0, node_block), :] = agg_rows

    @pl.when(jnp.logical_and(phase == 0, k == k_last))
    def _features_and_assignment():
        agg_full = agg_ref[...]
        deg = jnp.maximum(agg_full[:, :, -1:], 1.0)            # exact ints (f32 MXU acc)
        agg = agg_full * pl.reciprocal(deg, approx=True)
        h = (dn(agg, w_rel_ref[...], (((2,), (0,)), ((), ())), preferred_element_type=f32)
             + dn(x_ref[...].astype(f32), w_root_ref[...], (((2,), (0,)), ((), ())),
                  preferred_element_type=f32))                  # SAGE bias folded in last row
        h = jnp.maximum(h, 0.0)                                 # (Bb, N, Cp)
        logits = dn(h, w_assign_ref[...], (((2,), (0,)), ((), ())),
                    preferred_element_type=f32) + b_assign_ref[...]
        e0 = jnp.exp(logits - jnp.max(logits, axis=1, keepdims=True))
        s = e0 / jnp.sum(e0, axis=1, keepdims=True)             # softmax over nodes (dim=1)
        e1 = jnp.exp(s - jnp.max(s, axis=-1, keepdims=True))
        s = e1 / jnp.sum(e1, axis=-1, keepdims=True)            # softmax over clusters
        s_ref[...] = s
        xpool_ref[...] = dn(s, h, (((1,), (1,)), ((0,), (0,))),
                            preferred_element_type=f32)         # (Bb, T, Cp)
        ap_ref[...] = jnp.zeros_like(ap_ref)

    @pl.when(phase == 1)
    def _pool_adj_rows():
        s_chunk = s_ref[:, pl.ds(row0, node_block), :].astype(jnp.bfloat16)
        # (Bb, T, N) = s_chunk^T @ adj_rows   (bf16 x bf16 -> f32)
        sta = dn(s_chunk, adj_ref[...], (((1,), (1,)), ((0,), (0,))),
                 preferred_element_type=f32)
        ap_ref[...] += dn(sta, s_ref[...], (((2,), (1,)), ((0,), (0,))),
                          preferred_element_type=f32)           # f32 s on the right

    @pl.when(jnp.logical_and(phase == 1, k == k_last))
    def _write_adj_pool():
        adjpool_ref[...] = dn(ap_ref[...], pad_eye_ref[...], (((2,), (0,)), ((), ())),
                              preferred_element_type=f32)       # lane-pad T -> TP


# --------------------------------------------------------------------------------------
# Wrapper
# --------------------------------------------------------------------------------------
def diff_pool_layer(x, adj, params, *, block_batch=None, node_block=None):
    """x: (B, N, F_in), adj: (B, N, N) -> (x_pool (B,T,C), adj_pool (B,T,T))."""
    B, N, F_in = x.shape
    C = params["w_rel"].shape[1]
    T = params["w_assign"].shape[1]
    f32, bf16 = jnp.float32, jnp.bfloat16

    F1 = F_in + 1                                   # [x | 1]: degree + bias folded into MXU
    Cp = _round_up(max(C, 128), 128)                # lane-dense SAGE / x_pool width
    TP = _round_up(max(T, 128), 128)                # lane-dense adj_pool width

    if block_batch is not None:
        assert B % block_batch == 0
    if node_block is not None:
        assert N % node_block == 0 and (node_block % 8 == 0 or node_block == N)

    # ---- wrapper-side operand prep (padding / packing; padded h columns stay 0) ----
    w_rel_ext = jnp.zeros((F1, Cp), f32).at[:F_in, :C].set(params["w_rel"].astype(f32))
    w_root_ext = jnp.zeros((F1, Cp), f32).at[:F_in, :C].set(params["w_root"].astype(f32))
    w_root_ext = w_root_ext.at[F_in, :C].set(params["b_sage"].reshape(C).astype(f32))
    w_assign_ext = jnp.zeros((Cp, T), f32).at[:C, :].set(params["w_assign"].astype(f32))
    b_assign = params["b_assign"].reshape(1, T).astype(f32)
    pad_eye = jnp.eye(T, TP, dtype=f32)             # [I_T | 0] lane padder for adj_pool

    x_aug = jnp.concatenate([x.astype(f32), jnp.ones((B, N, 1), f32)], axis=-1).astype(bf16)
    adj_bf = adj.astype(bf16)                       # {0,1}: lossless, halves HBM/VMEM bytes
    # TODO(synk): on v7x an fp8(e4m3) adj stream would halve DMA again if Mosaic accepts
    # the operand combination; kept bf16 for v5e/v6e portability.

    phys = _vmem_phys_bytes()
    budget = int(phys * 0.55)                       # headroom for compiler-internal scratch
    vmem_limit = int(min(phys * 0.75, 100 * 1024 * 1024))
    cores = _num_tensorcores()

    Bb, Nk = _pick_schedule(B, N, F1, Cp, T, TP, budget, cores, block_batch, node_block)

    weight_args = (w_rel_ext, w_root_ext, w_assign_ext, b_assign, pad_eye)
    out_shape = (jax.ShapeDtypeStruct((B, T, Cp), f32),
                 jax.ShapeDtypeStruct((B, T, TP), f32))

    if Nk is None:
        grid_spec = pltpu.PrefetchScalarGridSpec(
            num_scalar_prefetch=0,
            grid=(B // Bb,),
            in_specs=[
                pl.BlockSpec((Bb, N, F1), lambda b: (b, 0, 0)),   # [x | 1]  (bf16)
                pl.BlockSpec((Bb, N, N),  lambda b: (b, 0, 0)),   # adj      (bf16)
                pl.BlockSpec((F1, Cp),    lambda b: (0, 0)),      # W_rel_ext
                pl.BlockSpec((F1, Cp),    lambda b: (0, 0)),      # W_root_ext (+bias row)
                pl.BlockSpec((Cp, T),     lambda b: (0, 0)),      # W_assign_ext
                pl.BlockSpec((1, T),      lambda b: (0, 0)),      # b_assign
                pl.BlockSpec((T, TP),     lambda b: (0, 0)),      # [I_T | 0]
            ],
            out_specs=[
                pl.BlockSpec((Bb, T, Cp), lambda b: (b, 0, 0)),
                pl.BlockSpec((Bb, T, TP), lambda b: (b, 0, 0)),
            ],
        )
        xp, ap = pl.pallas_call(
            _diffpool_kernel_resident,
            out_shape=out_shape,
            grid_spec=grid_spec,
            compiler_params=pltpu.CompilerParams(
                dimension_semantics=("parallel",),
                vmem_limit_bytes=vmem_limit),
        )(x_aug, adj_bf, *weight_args)
    else:
        K = N // Nk
        grid_spec = pltpu.PrefetchScalarGridSpec(
            num_scalar_prefetch=0,
            grid=(B // Bb, 2, K),
            in_specs=[
                pl.BlockSpec((Bb, N, F1), lambda b, p, k: (b, 0, 0)),
                pl.BlockSpec((Bb, Nk, N), lambda b, p, k: (b, k, 0)),   # adj row chunks
                pl.BlockSpec((F1, Cp),    lambda b, p, k: (0, 0)),
                pl.BlockSpec((F1, Cp),    lambda b, p, k: (0, 0)),
                pl.BlockSpec((Cp, T),     lambda b, p, k: (0, 0)),
                pl.BlockSpec((1, T),      lambda b, p, k: (0, 0)),
                pl.BlockSpec((T, TP),     lambda b, p, k: (0, 0)),
            ],
            out_specs=[
                pl.BlockSpec((Bb, T, Cp), lambda b, p, k: (b, 0, 0)),
                pl.BlockSpec((Bb, T, TP), lambda b, p, k: (b, 0, 0)),
            ],
            scratch_shapes=[
                pltpu.VMEM((Bb, N, F1), f32),   # agg (+ degree column)
                pltpu.VMEM((Bb, N, T), f32),    # assignment matrix s
                pltpu.VMEM((Bb, T, T), f32),    # adj_pool accumulator
            ],
        )
        xp, ap = pl.pallas_call(
            functools.partial(_diffpool_kernel_tiled, node_block=Nk),
            out_shape=out_shape,
            grid_spec=grid_spec,
            compiler_params=pltpu.CompilerParams(
                dimension_semantics=("parallel", "arbitrary", "arbitrary"),
                vmem_limit_bytes=vmem_limit),
        )(x_aug, adj_bf, *weight_args)

    # Strip lane padding (plain XLA slices outside the kernel).
    return xp[:, :, :C], ap[:, :, :T]


def diff_pool_layer_ref(x, adj, params):
    """Pure-JAX reference mirroring the PyTorch semantics."""
    agg = jnp.einsum("bij,bjf->bif", adj, x)
    deg = jnp.maximum(jnp.sum(adj, axis=-1, keepdims=True), 1.0)
    h = (jnp.einsum("bnf,fc->bnc", agg / deg, params["w_rel"])
         + jnp.einsum("bnf,fc->bnc", x, params["w_root"])
         + params["b_sage"])
    h = jax.nn.relu(h)
    logits = jnp.einsum("bnc,ct->bnt", h, params["w_assign"]) + params["b_assign"]
    s = jax.nn.softmax(logits, axis=1)      # dim=1 (nodes), as in the module
    s = jax.nn.softmax(s, axis=-1)          # inside dense_diff_pool
    x_pool = jnp.einsum("bnt,bnc->btc", s, h)
    adj_pool = jnp.einsum("bnt,bnm,bmk->btk", s, adj, s)
    return x_pool, adj_pool


if __name__ == "__main__":
    # Shapes consistent with DiffPoolLayer(input_features=8, output_features=32,
    # num_nodes=16, target_nodes=8) on a batch of 8 graphs.
    B, N, F_in, C, T = 8, 16, 8, 32, 8

    key = jax.random.PRNGKey(0)
    kx, kadj, k1, k2, k3, k4, k5 = jax.random.split(key, 7)

    x = jax.random.normal(kx, (B, N, F_in), dtype=jnp.float32)
    # Symmetric adjacency with self-loops (values in {0,1}).
    a = (jax.random.uniform(kadj, (B, N, N)) > 0.6).astype(jnp.float32)
    adj = jnp.clip(a + jnp.swapaxes(a, 1, 2) + jnp.eye(N)[None], 0.0, 1.0)

    params = {
        "w_rel":    0.1 * jax.random.normal(k1, (F_in, C), dtype=jnp.float32),
        "w_root":   0.1 * jax.random.normal(k2, (F_in, C), dtype=jnp.float32),
        "b_sage":   0.1 * jax.random.normal(k3, (1, C), dtype=jnp.float32),
        "w_assign": 0.1 * jax.random.normal(k4, (C, T), dtype=jnp.float32),
        "b_assign": 0.1 * jax.random.normal(k5, (1, T), dtype=jnp.float32),
    }

    # Auto-scheduled path (adj-resident kernel at these shapes).
    x_pool, adj_pool = diff_pool_layer(x, adj, params)
    # Also force the node-tiled two-phase path so it is validated at small shapes.
    x_pool_t, adj_pool_t = diff_pool_layer(x, adj, params, block_batch=4, node_block=8)
    jax.block_until_ready((x_pool, adj_pool, x_pool_t, adj_pool_t))

    x_pool_ref, adj_pool_ref = diff_pool_layer_ref(x, adj, params)
    assert x_pool.shape == (B, T, C) and adj_pool.shape == (B, T, T)
    assert x_pool_t.shape == (B, T, C) and adj_pool_t.shape == (B, T, T)
    # Tolerance covers bf16 adj/x/s MXU operands + approx reciprocal for the degree
    # (both softmax denominators now use exact division).
    tol = dict(atol=2e-2, rtol=2e-2)
    assert jnp.allclose(x_pool, x_pool_ref, **tol)
    assert jnp.allclose(adj_pool, adj_pool_ref, **tol)
    assert jnp.allclose(x_pool_t, x_pool_ref, **tol)
    assert jnp.allclose(adj_pool_t, adj_pool_ref, **tol)

    print("KERNEL_OK")
</pallas_src>

<mosaic_0001>
module attributes {stable_mosaic.version = 11 : i64} {
  func.func @_diffpool_kernel_resident(%arg0: i32, %arg1: memref<8x16x9xbf16, #tpu.memory_space<vmem>>, %arg2: memref<8x16x16xbf16, #tpu.memory_space<vmem>>, %arg3: memref<9x128xf32, #tpu.memory_space<vmem>>, %arg4: memref<9x128xf32, #tpu.memory_space<vmem>>, %arg5: memref<128x8xf32, #tpu.memory_space<vmem>>, %arg6: memref<1x8xf32, #tpu.memory_space<vmem>>, %arg7: memref<8x128xf32, #tpu.memory_space<vmem>>, %arg8: memref<8x8x128xf32, #tpu.memory_space<vmem>>, %arg9: memref<8x8x128xf32, #tpu.memory_space<vmem>>) attributes {dimension_semantics = [#tpu.dimension_semantics<parallel>], iteration_bounds = array<i64: 1>, scalar_prefetch = 0 : i64, scratch_operands = 0 : i64, tpu.core_type = #tpu.core_type<tc>, window_params = [{transform_indices = @transform_0, window_bounds = array<i64: 8, 16, 9>}, {transform_indices = @transform_1, window_bounds = array<i64: 8, 16, 16>}, {pipeline_mode = #tpu.pipeline_mode<synchronous>, transform_indices = @transform_2, window_bounds = array<i64: 9, 128>}, {pipeline_mode = #tpu.pipeline_mode<synchronous>, transform_indices = @transform_3, window_bounds = array<i64: 9, 128>}, {pipeline_mode = #tpu.pipeline_mode<synchronous>, transform_indices = @transform_4, window_bounds = array<i64: 128, 8>}, {pipeline_mode = #tpu.pipeline_mode<synchronous>, transform_indices = @transform_5, window_bounds = array<i64: 1, 8>}, {pipeline_mode = #tpu.pipeline_mode<synchronous>, transform_indices = @transform_6, window_bounds = array<i64: 8, 128>}, {transform_indices = @transform_7, window_bounds = array<i64: 8, 8, 128>}, {transform_indices = @transform_8, window_bounds = array<i64: 8, 8, 128>}]} {
    %c0 = arith.constant 0 : index
    %c0_0 = arith.constant 0 : index
    %c0_1 = arith.constant 0 : index
    %0 = vector.load %arg1[%c0, %c0_0, %c0_1] : memref<8x16x9xbf16, #tpu.memory_space<vmem>>, vector<8x16x9xbf16>
    %c0_2 = arith.constant 0 : index
    %c0_3 = arith.constant 0 : index
    %c0_4 = arith.constant 0 : index
    %1 = vector.load %arg2[%c0_2, %c0_3, %c0_4] : memref<8x16x16xbf16, #tpu.memory_space<vmem>>, vector<8x16x16xbf16>
    %cst = arith.constant dense<0.000000e+00> : vector<8x16x9xf32>
    %2 = tpu.matmul %1, %0, %cst {dimension_numbers = #tpu.dot_dimension_numbers<[2], [1], [1], [2], [0, 0, 0, 1, 1, 2], [0], [0]>} : vector<8x16x16xbf16>, vector<8x16x9xbf16>, vector<8x16x9xf32> -> vector<8x16x9xf32>
    %3 = vector.extract_strided_slice %2 {offsets = [0, 0, 8], sizes = [8, 16, 1], strides = [1, 1, 1]} : vector<8x16x9xf32> to vector<8x16x1xf32>
    %cst_5 = arith.constant 1.000000e+00 : f32
    %4 = vector.broadcast %cst_5 : f32 to vector<8x16x1xf32>
    %5 = arith.maximumf %3, %4 : vector<8x16x1xf32>
    %6 = tpu.reciprocal %5 {approx = true} : vector<8x16x1xf32> -> vector<8x16x1xf32>
    %7 = vector.broadcast %6 : vector<8x16x1xf32> to vector<8x16x9xf32>
    %8 = arith.mulf %2, %7 : vector<8x16x9xf32>
    %c0_6 = arith.constant 0 : index
    %c0_7 = arith.constant 0 : index
    %9 = vector.load %arg3[%c0_6, %c0_7] : memref<9x128xf32, #tpu.memory_space<vmem>>, vector<9x128xf32>
    %cst_8 = arith.constant dense<0.000000e+00> : vector<8x16x128xf32>
    %10 = tpu.matmul %8, %9, %cst_8 {dimension_numbers = #tpu.dot_dimension_numbers<[2], [0], [0, 1], [1], [0, 0, 0, 1, 1, 1], [], []>} : vector<8x16x9xf32>, vector<9x128xf32>, vector<8x16x128xf32> -> vector<8x16x128xf32>
    %11 = arith.extf %0 : vector<8x16x9xbf16> to vector<8x16x9xf32>
    %c0_9 = arith.constant 0 : index
    %c0_10 = arith.constant 0 : index
    %12 = vector.load %arg4[%c0_9, %c0_10] : memref<9x128xf32, #tpu.memory_space<vmem>>, vector<9x128xf32>
    %cst_11 = arith.constant dense<0.000000e+00> : vector<8x16x128xf32>
    %13 = tpu.matmul %11, %12, %cst_11 {dimension_numbers = #tpu.dot_dimension_numbers<[2], [0], [0, 1], [1], [0, 0, 0, 1, 1, 1], [], []>} : vector<8x16x9xf32>, vector<9x128xf32>, vector<8x16x128xf32> -> vector<8x16x128xf32>
    %14 = arith.addf %10, %13 : vector<8x16x128xf32>
    %cst_12 = arith.constant 0.000000e+00 : f32
    %15 = vector.broadcast %cst_12 : f32 to vector<8x16x128xf32>
    %16 = arith.maximumf %14, %15 : vector<8x16x128xf32>
    %c0_13 = arith.constant 0 : index
    %c0_14 = arith.constant 0 : index
    %17 = vector.load %arg5[%c0_13, %c0_14] : memref<128x8xf32, #tpu.memory_space<vmem>>, vector<128x8xf32>
    %cst_15 = arith.constant dense<0.000000e+00> : vector<8x16x8xf32>
    %18 = tpu.matmul %16, %17, %cst_15 {dimension_numbers = #tpu.dot_dimension_numbers<[2], [0], [0, 1], [1], [0, 0, 0, 1, 1, 1], [], []>} : vector<8x16x128xf32>, vector<128x8xf32>, vector<8x16x8xf32> -> vector<8x16x8xf32>
    %c0_16 = arith.constant 0 : index
    %c0_17 = arith.constant 0 : index
    %19 = vector.load %arg6[%c0_16, %c0_17] : memref<1x8xf32, #tpu.memory_space<vmem>>, vector<1x8xf32>
    %20 = vector.shape_cast %19 : vector<1x8xf32> to vector<1x1x8xf32>
    %21 = vector.broadcast %20 : vector<1x1x8xf32> to vector<8x16x8xf32>
    %22 = arith.addf %18, %21 : vector<8x16x8xf32>
    %cst_18 = arith.constant dense<0xFF800000> : vector<8x8xf32>
    %23 = vector.multi_reduction <maximumf>, %22, %cst_18 [1] : vector<8x16x8xf32> to vector<8x8xf32>
    %24 = vector.shape_cast %23 : vector<8x8xf32> to vector<8x1x8xf32>
    %25 = vector.broadcast %24 : vector<8x1x8xf32> to vector<8x16x8xf32>
    %26 = arith.subf %22, %25 : vector<8x16x8xf32>
    %27 = math.exp %26 : vector<8x16x8xf32>
    %cst_19 = arith.constant dense<0.000000e+00> : vector<8x8xf32>
    %28 = vector.multi_reduction <add>, %27, %cst_19 [1] : vector<8x16x8xf32> to vector<8x8xf32>
    %29 = vector.shape_cast %28 : vector<8x8xf32> to vector<8x1x8xf32>
    %30 = vector.broadcast %29 : vector<8x1x8xf32> to vector<8x16x8xf32>
    %31 = arith.divf %27, %30 : vector<8x16x8xf32>
    %cst_20 = arith.constant dense<0xFF800000> : vector<8x16xf32>
    %32 = vector.multi_reduction <maximumf>, %31, %cst_20 [2] : vector<8x16x8xf32> to vector<8x16xf32>
    %33 = vector.shape_cast %32 : vector<8x16xf32> to vector<8x16x1xf32>
    %34 = vector.broadcast %33 : vector<8x16x1xf32> to vector<8x16x8xf32>
    %35 = arith.subf %31, %34 : vector<8x16x8xf32>
    %36 = math.exp %35 : vector<8x16x8xf32>
    %cst_21 = arith.constant dense<0.000000e+00> : vector<8x16xf32>
    %37 = vector.multi_reduction <add>, %36, %cst_21 [2] : vector<8x16x8xf32> to vector<8x16xf32>
    %38 = vector.shape_cast %37 : vector<8x16xf32> to vector<8x16x1xf32>
    %39 = vector.broadcast %38 : vector<8x16x1xf32> to vector<8x16x8xf32>
    %40 = arith.divf %36, %39 : vector<8x16x8xf32>
    %cst_22 = arith.constant dense<0.000000e+00> : vector<8x8x128xf32>
    %41 = tpu.matmul %40, %16, %cst_22 {dimension_numbers = #tpu.dot_dimension_numbers<[1], [1], [2], [2], [0, 0, 0, 2, 1, 2], [0], [0]>} : vector<8x16x8xf32>, vector<8x16x128xf32>, vector<8x8x128xf32> -> vector<8x8x128xf32>
    %c0_23 = arith.constant 0 : index
    %c0_24 = arith.constant 0 : index
    %c0_25 = arith.constant 0 : index
    %42 = vector.load %arg8[%c0_23, %c0_24, %c0_25] : memref<8x8x128xf32, #tpu.memory_space<vmem>>, vector<8x8x128xf32>
    tpu.vector_store %arg8[%c0_23, %c0_24, %c0_25], %41 {strides = array<i32>} : memref<8x8x128xf32, #tpu.memory_space<vmem>>, vector<8x8x128xf32>,
    %43 = arith.truncf %40 : vector<8x16x8xf32> to vector<8x16x8xbf16>
    %cst_26 = arith.constant dense<0.000000e+00> : vector<8x8x16xf32>
    %44 = tpu.matmul %43, %1, %cst_26 {dimension_numbers = #tpu.dot_dimension_numbers<[1], [1], [2], [2], [0, 0, 0, 2, 1, 2], [0], [0]>} : vector<8x16x8xbf16>, vector<8x16x16xbf16>, vector<8x8x16xf32> -> vector<8x8x16xf32>
    %cst_27 = arith.constant dense<0.000000e+00> : vector<8x8x8xf32>
    %45 = tpu.matmul %44, %40, %cst_27 {dimension_numbers = #tpu.dot_dimension_numbers<[2], [1], [1], [2], [0, 0, 0, 1, 1, 2], [0], [0]>} : vector<8x8x16xf32>, vector<8x16x8xf32>, vector<8x8x8xf32> -> vector<8x8x8xf32>
    %c0_28 = arith.constant 0 : index
    %c0_29 = arith.constant 0 : index
    %46 = vector.load %arg7[%c0_28, %c0_29] : memref<8x128xf32, #tpu.memory_space<vmem>>, vector<8x128xf32>
    %cst_30 = arith.constant dense<0.000000e+00> : vector<8x8x128xf32>
    %47 = tpu.matmul %45, %46, %cst_30 {dimension_numbers = #tpu.dot_dimension_numbers<[2], [0], [0, 1], [1], [0, 0, 0, 1, 1, 1], [], []>} : vector<8x8x8xf32>, vector<8x128xf32>, vector<8x8x128xf32> -> vector<8x8x128xf32>
    %c0_31 = arith.constant 0 : index
    %c0_32 = arith.constant 0 : index
    %c0_33 = arith.constant 0 : index
    %48 = vector.load %arg9[%c0_31, %c0_32, %c0_33] : memref<8x8x128xf32, #tpu.memory_space<vmem>>, vector<8x8x128xf32>
    tpu.vector_store %arg9[%c0_31, %c0_32, %c0_33], %47 {strides = array<i32>} : memref<8x8x128xf32, #tpu.memory_space<vmem>>, vector<8x8x128xf32>,
    return
  }
  func.func @transform_0(%arg0: i32) -> (i32, i32, i32) {
    %c0_i32 = arith.constant 0 : i32
    %c0_i32_0 = arith.constant 0 : i32
    %c0_i32_1 = arith.constant 0 : i32
    return %arg0, %c0_i32, %c0_i32_0 : i32, i32, i32
  }
  func.func @transform_1(%arg0: i32) -> (i32, i32, i32) {
    %c0_i32 = arith.constant 0 : i32
    %c0_i32_0 = arith.constant 0 : i32
    %c0_i32_1 = arith.constant 0 : i32
    return %arg0, %c0_i32, %c0_i32_0 : i32, i32, i32
  }
  func.func @transform_2(%arg0: i32) -> (i32, i32) {
    %c0_i32 = arith.constant 0 : i32
    %c0_i32_0 = arith.constant 0 : i32
    %c0_i32_1 = arith.constant 0 : i32
    return %c0_i32, %c0_i32_0 : i32, i32
  }
  func.func @transform_3(%arg0: i32) -> (i32, i32) {
    %c0_i32 = arith.constant 0 : i32
    %c0_i32_0 = arith.constant 0 : i32
    %c0_i32_1 = arith.constant 0 : i32
    return %c0_i32, %c0_i32_0 : i32, i32
  }
  func.func @transform_4(%arg0: i32) -> (i32, i32) {
    %c0_i32 = arith.constant 0 : i32
    %c0_i32_0 = arith.constant 0 : i32
    %c0_i32_1 = arith.constant 0 : i32
    return %c0_i32, %c0_i32_0 : i32, i32
  }
  func.func @transform_5(%arg0: i32) -> (i32, i32) {
    %c0_i32 = arith.constant 0 : i32
    %c0_i32_0 = arith.constant 0 : i32
    %c0_i32_1 = arith.constant 0 : i32
    return %c0_i32, %c0_i32_0 : i32, i32
  }
  func.func @transform_6(%arg0: i32) -> (i32, i32) {
    %c0_i32 = arith.constant 0 : i32
    %c0_i32_0 = arith.constant 0 : i32
    %c0_i32_1 = arith.constant 0 : i32
    return %c0_i32, %c0_i32_0 : i32, i32
  }
  func.func @transform_7(%arg0: i32) -> (i32, i32, i32) {
    %c0_i32 = arith.constant 0 : i32
    %c0_i32_0 = arith.constant 0 : i32
    %c0_i32_1 = arith.constant 0 : i32
    return %arg0, %c0_i32, %c0_i32_0 : i32, i32, i32
  }
  func.func @transform_8(%arg0: i32) -> (i32, i32, i32) {
    %c0_i32 = arith.constant 0 : i32
    %c0_i32_0 = arith.constant 0 : i32
    %c0_i32_1 = arith.constant 0 : i32
    return %arg0, %c0_i32, %c0_i32_0 : i32, i32, i32
  }
}

</mosaic_0001>

<llo_original>
// kernel: tpu_custom_call.1
$region0: #{tpu_custom_call.1}
  #allocation0 [shape = 'u32[]', space=smem, size = 0x4, offset = 0x4, fixed_abs, tag = 'smem constant byte address 0x4 - core index']
  #allocation1 [shape = 'u32[72,128]{1,0:T(1,128)}', space=vmem, size = 0x9000, scoped, tag = 'internal scratch']
  %s0 = inlined_call_operand.vmem [shape: bf16[8,16,9], index: 0, kind: input, shape index: {}]
  %s1 = inlined_call_operand.vmem [shape: bf16[8,16,16], index: 1, kind: input, shape index: {}]
  %s2 = inlined_call_operand.vmem [shape: f32[9,128], index: 2, kind: input, shape index: {}]
  %s3 = inlined_call_operand.vmem [shape: f32[9,128], index: 3, kind: input, shape index: {}]
  %s4 = inlined_call_operand.vmem [shape: f32[128,8], index: 4, kind: input, shape index: {}]
  %s5 = inlined_call_operand.vmem [shape: f32[1,8], index: 5, kind: input, shape index: {}]
  %s6 = inlined_call_operand.vmem [shape: f32[8,128], index: 6, kind: input, shape index: {}]
  %s7 = inlined_call_operand.hbm [shape: f32[8,8,128], index: 7, kind: output, shape index: {0}]
  %s8 = inlined_call_operand.hbm [shape: f32[8,8,128], index: 8, kind: output, shape index: {1}]
  %9 = xla_tuple %s7, %s8
  %s10 = sld [smem:[#allocation0]]
  $region46: #{tpu_custom_call.1} parent=0
    _
  %s12 = ssub.s32 1, %s10
  %s13 = scalar_select 0, %s12, %s10
  $region1: #{tpu_custom_call.1} parent=0
    #allocation2 [shape = 'u8[32768]{0}', space=vmem, size = 0x8000, scoped, tag = 'output window, operand 0, single buffered']
    #allocation3 [shape = 's32[1]{0}', space=sflag, size = 0x4, scoped, tag = 'scoped memory for tpu_custom_call.1']
    #allocation4 [shape = 'u8[32768]{0}', space=vmem, size = 0x8000, scoped, tag = 'output window, operand 1, single buffered']
    #allocation5 [shape = 's32[1]{0}', space=sflag, size = 0x4, scoped, tag = 'scoped memory for tpu_custom_call.1']
    %14 = vsyncpa [#allocation3], 0
    %15 = vsyncpa [#allocation5], 0
    // Predicated region
    $region2: #{tpu_custom_call.1} parent=1 // pred_check
      _
    $region3: #{tpu_custom_call.1} parent=1 // pred_check_branch
      %17 = sbr.rel (0) target = $region5
    $region4: #{tpu_custom_call.1} parent=1 // pred_region
      _
    $region5: #{tpu_custom_call.1} parent=1 // pred_fallthru
      _
    // Predicated region
    $region6: #{tpu_custom_call.1} parent=1 // pred_check
      _
    $region7: #{tpu_custom_call.1} parent=1 // pred_check_branch
      %19 = sbr.rel (0) target = $region9
    $region8: #{tpu_custom_call.1} parent=1 // pred_region
      _
    $region9: #{tpu_custom_call.1} parent=1 // pred_fallthru
      _
    // Predicated region
    $region10: #{tpu_custom_call.1} parent=1 // pred_check
      _
    $region11: #{tpu_custom_call.1} parent=1 // pred_check_branch
      %21 = sbr.rel (0) target = $region13
    $region12: #{tpu_custom_call.1} parent=1 // pred_region
      _
    $region13: #{tpu_custom_call.1} parent=1 // pred_fallthru
      _
    // Predicated region
    $region14: #{tpu_custom_call.1} parent=1 // pred_check
      _
    $region15: #{tpu_custom_call.1} parent=1 // pred_check_branch
      %23 = sbr.rel (0) target = $region17
    $region16: #{tpu_custom_call.1} parent=1 // pred_region
      _
    $region17: #{tpu_custom_call.1} parent=1 // pred_fallthru
      _
    // Predicated region
    $region18: #{tpu_custom_call.1} parent=1 // pred_check
      _
    $region19: #{tpu_custom_call.1} parent=1 // pred_check_branch
      %25 = sbr.rel (0) target = $region21
    $region20: #{tpu_custom_call.1} parent=1 // pred_region
      _
    $region21: #{tpu_custom_call.1} parent=1 // pred_fallthru
      _
    // Predicated region
    $region22: #{tpu_custom_call.1} parent=1 // pred_check
      _
    $region23: #{tpu_custom_call.1} parent=1 // pred_check_branch
      %27 = sbr.rel (0) target = $region25
    $region24: #{tpu_custom_call.1} parent=1 // pred_region
      _
    $region25: #{tpu_custom_call.1} parent=1 // pred_fallthru
      _
    // Predicated region
    $region26: #{tpu_custom_call.1} parent=1 // pred_check
      _
    $region27: #{tpu_custom_call.1} parent=1 // pred_check_branch
      %29 = sbr.rel (0) target = $region29
    $region28: #{tpu_custom_call.1} parent=1 // pred_region
      _
    $region29: #{tpu_custom_call.1} parent=1 // pred_fallthru
      _
    %v31 = vld [vmem:[%s0] sm:$0xf]
    %v32 = vld [vmem:[%s0 + $0x4] sm:$0xf]
    %v33 = vld [vmem:[%s0 + $0x8] sm:$0xf]
    %v34 = vld [vmem:[%s0 + $0xc] sm:$0xf]
    %v35 = vld [vmem:[%s0 + $0x10] sm:$0xf]
    %v36 = vld [vmem:[%s0 + $0x14] sm:$0xf]
    %v37 = vld [vmem:[%s0 + $0x18] sm:$0xf]
    %v38 = vld [vmem:[%s0 + $0x1c] sm:$0xf]
    %v39 = vld [vmem:[%s0 + $0x20] sm:$0xf]
    %v40 = vld [vmem:[%s0 + $0x24] sm:$0xf]
    %v41 = vld [vmem:[%s0 + $0x28] sm:$0xf]
    %v42 = vld [vmem:[%s0 + $0x2c] sm:$0xf]
    %v43 = vld [vmem:[%s0 + $0x30] sm:$0xf]
    %v44 = vld [vmem:[%s0 + $0x34] sm:$0xf]
    %v45 = vld [vmem:[%s0 + $0x38] sm:$0xf]
    %v46 = vld [vmem:[%s0 + $0x3c] sm:$0xf]
    %v47 = vld [vmem:[%s1] sm:$0xf]
    %v48 = vld [vmem:[%s1 + $0x4] sm:$0xf]
    %v49 = vld [vmem:[%s1 + $0x8] sm:$0xf]
    %v50 = vld [vmem:[%s1 + $0xc] sm:$0xf]
    %v51 = vld [vmem:[%s1 + $0x10] sm:$0xf]
    %v52 = vld [vmem:[%s1 + $0x14] sm:$0xf]
    %v53 = vld [vmem:[%s1 + $0x18] sm:$0xf]
    %v54 = vld [vmem:[%s1 + $0x1c] sm:$0xf]
    %v55 = vld [vmem:[%s1 + $0x20] sm:$0xf]
    %v56 = vld [vmem:[%s1 + $0x24] sm:$0xf]
    %v57 = vld [vmem:[%s1 + $0x28] sm:$0xf]
    %v58 = vld [vmem:[%s1 + $0x2c] sm:$0xf]
    %v59 = vld [vmem:[%s1 + $0x30] sm:$0xf]
    %v60 = vld [vmem:[%s1 + $0x34] sm:$0xf]
    %v61 = vld [vmem:[%s1 + $0x38] sm:$0xf]
    %v62 = vld [vmem:[%s1 + $0x3c] sm:$0xf]
    %v65 = vunpack.c.l.b16 %v47
    %v66 = vunpack.c.l.b16 %v48
    %v67 = vpack.c.b16 %v66, %v65
    %v70 = vunpack.c.l.b16 %v31
    %v71 = vunpack.c.l.b16 %v32
    %v72 = vpack.c.b16 %v71, %v70
    %vm74 = vcmask 130048
    %v76 = vsel %vm74, %v67, 0
    %78 = vmatpush.bf16.msra.mxu0 0
    %79 = vmatpush.bf16.msra.mxu0 0
    %80 = vmatpush.bf16.msra.mxu0 0
    %81 = vmatpush.bf16.msra.mxu0 0
    %82 = vmatpush.bf16.msra.mxu0 0
    %83 = vmatpush.bf16.msra.mxu0 0
    %84 = vmatpush.bf16.msra.mxu0 0
    %85 = vmatpush.bf16.msra.mxu0 %v72
    %86 = vmatmul.bf16.gmra.mxu0 %v76
    %v87 = vpop.f32.mrf.mxu0
    %v88 = vadd.f32 0.0, %v87
    %v89 = vpop.f32.mrf.mxu0
    %v90 = vadd.f32 0.0, %v89
    %91 = vdwg.mxu0
    %v94 = vunpack.c.l.b16 %v49
    %v95 = vunpack.c.l.b16 %v50
    %v96 = vpack.c.b16 %v95, %v94
    %v99 = vunpack.c.l.b16 %v33
    %v100 = vunpack.c.l.b16 %v34
    %v101 = vpack.c.b16 %v100, %v99
    %v104 = vsel %vm74, %v96, 0
    %106 = vmatpush.bf16.msra.mxu0 0
    %107 = vmatpush.bf16.msra.mxu0 0
    %108 = vmatpush.bf16.msra.mxu0 0
    %109 = vmatpush.bf16.msra.mxu0 0
    %110 = vmatpush.bf16.msra.mxu0 0
    %111 = vmatpush.bf16.msra.mxu0 0
    %112 = vmatpush.bf16.msra.mxu0 0
    %113 = vmatpush.bf16.msra.mxu0 %v101
    %114 = vmatmul.bf16.gmra.mxu0 %v104
    %v115 = vpop.f32.mrf.mxu0
    %v116 = vadd.f32 0.0, %v115
    %v117 = vpop.f32.mrf.mxu0
    %v118 = vadd.f32 0.0, %v117
    %119 = vdwg.mxu0
    %v122 = vunpack.c.l.b16 %v51
    %v123 = vunpack.c.l.b16 %v52
    %v124 = vpack.c.b16 %v123, %v122
    %v127 = vunpack.c.l.b16 %v35
    %v128 = vunpack.c.l.b16 %v36
    %v129 = vpack.c.b16 %v128, %v127
    %v132 = vsel %vm74, %v124, 0
    %134 = vmatpush.bf16.msra.mxu0 0
    %135 = vmatpush.bf16.msra.mxu0 0
    %136 = vmatpush.bf16.msra.mxu0 0
    %137 = vmatpush.bf16.msra.mxu0 0
    %138 = vmatpush.bf16.msra.mxu0 0
    %139 = vmatpush.bf16.msra.mxu0 0
    %140 = vmatpush.bf16.msra.mxu0 0
    %141 = vmatpush.bf16.msra.mxu0 %v129
    %142 = vmatmul.bf16.gmra.mxu0 %v132
    %v143 = vpop.f32.mrf.mxu0
    %v144 = vadd.f32 0.0, %v143
    %v145 = vpop.f32.mrf.mxu0
    %v146 = vadd.f32 0.0, %v145
    %147 = vdwg.mxu0
    %v150 = vunpack.c.l.b16 %v53
    %v151 = vunpack.c.l.b16 %v54
    %v152 = vpack.c.b16 %v151, %v150
    %v155 = vunpack.c.l.b16 %v37
    %v156 = vunpack.c.l.b16 %v38
    %v157 = vpack.c.b16 %v156, %v155
    %v160 = vsel %vm74, %v152, 0
    %162 = vmatpush.bf16.msra.mxu0 0
    %163 = vmatpush.bf16.msra.mxu0 0
    %164 = vmatpush.bf16.msra.mxu0 0
    %165 = vmatpush.bf16.msra.mxu0 0
    %166 = vmatpush.bf16.msra.mxu0 0
    %167 = vmatpush.bf16.msra.mxu0 0
    %168 = vmatpush.bf16.msra.mxu0 0
    %169 = vmatpush.bf16.msra.mxu0 %v157
    %170 = vmatmul.bf16.gmra.mxu0 %v160
    %v171 = vpop.f32.mrf.mxu0
    %v172 = vadd.f32 0.0, %v171
    %v173 = vpop.f32.mrf.mxu0
    %v174 = vadd.f32 0.0, %v173
    %175 = vdwg.mxu0
    %v178 = vunpack.c.l.b16 %v55
    %v179 = vunpack.c.l.b16 %v56
    %v180 = vpack.c.b16 %v179, %v178
    %v183 = vunpack.c.l.b16 %v39
    %v184 = vunpack.c.l.b16 %v40
    %v185 = vpack.c.b16 %v184, %v183
    %v188 = vsel %vm74, %v180, 0
    %190 = vmatpush.bf16.msra.mxu0 0
    %191 = vmatpush.bf16.msra.mxu0 0
    %192 = vmatpush.bf16.msra.mxu0 0
    %193 = vmatpush.bf16.msra.mxu0 0
    %194 = vmatpush.bf16.msra.mxu0 0
    %195 = vmatpush.bf16.msra.mxu0 0
    %196 = vmatpush.bf16.msra.mxu0 0
    %197 = vmatpush.bf16.msra.mxu0 %v185
    %198 = vmatmul.bf16.gmra.mxu0 %v188
    %v199 = vpop.f32.mrf.mxu0
    %v200 = vadd.f32 0.0, %v199
    %v201 = vpop.f32.mrf.mxu0
    %v202 = vadd.f32 0.0, %v201
    %203 = vdwg.mxu0
    %v206 = vunpack.c.l.b16 %v57
    %v207 = vunpack.c.l.b16 %v58
    %v208 = vpack.c.b16 %v207, %v206
    %v211 = vunpack.c.l.b16 %v41
    %v212 = vunpack.c.l.b16 %v42
    %v213 = vpack.c.b16 %v212, %v211
    %v216 = vsel %vm74, %v208, 0
    %218 = vmatpush.bf16.msra.mxu0 0
    %219 = vmatpush.bf16.msra.mxu0 0
    %220 = vmatpush.bf16.msra.mxu0 0
    %221 = vmatpush.bf16.msra.mxu0 0
    %222 = vmatpush.bf16.msra.mxu0 0
    %223 = vmatpush.bf16.msra.mxu0 0
    %224 = vmatpush.bf16.msra.mxu0 0
    %225 = vmatpush.bf16.msra.mxu0 %v213
    %226 = vmatmul.bf16.gmra.mxu0 %v216
    %v227 = vpop.f32.mrf.mxu0
    %v228 = vadd.f32 0.0, %v227
    %v229 = vpop.f32.mrf.mxu0
    %v230 = vadd.f32 0.0, %v229
    %231 = vdwg.mxu0
    %v234 = vunpack.c.l.b16 %v59
    %v235 = vunpack.c.l.b16 %v60
    %v236 = vpack.c.b16 %v235, %v234
    %v239 = vunpack.c.l.b16 %v43
    %v240 = vunpack.c.l.b16 %v44
    %v241 = vpack.c.b16 %v240, %v239
    %v244 = vsel %vm74, %v236, 0
    %246 = vmatpush.bf16.msra.mxu0 0
    %247 = vmatpush.bf16.msra.mxu0 0
    %248 = vmatpush.bf16.msra.mxu0 0
    %249 = vmatpush.bf16.msra.mxu0 0
    %250 = vmatpush.bf16.msra.mxu0 0
    %251 = vmatpush.bf16.msra.mxu0 0
    %252 = vmatpush.bf16.msra.mxu0 0
    %253 = vmatpush.bf16.msra.mxu0 %v241
    %254 = vmatmul.bf16.gmra.mxu0 %v244
    %v255 = vpop.f32.mrf.mxu0
    %v256 = vadd.f32 0.0, %v255
    %v257 = vpop.f32.mrf.mxu0
    %v258 = vadd.f32 0.0, %v257
    %259 = vdwg.mxu0
    %v262 = vunpack.c.l.b16 %v61
    %v263 = vunpack.c.l.b16 %v62
    %v264 = vpack.c.b16 %v263, %v262
    %v267 = vunpack.c.l.b16 %v45
    %v268 = vunpack.c.l.b16 %v46
    %v269 = vpack.c.b16 %v268, %v267
    %v272 = vsel %vm74, %v264, 0
    %274 = vmatpush.bf16.msra.mxu0 0
    %275 = vmatpush.bf16.msra.mxu0 0
    %276 = vmatpush.bf16.msra.mxu0 0
    %277 = vmatpush.bf16.msra.mxu0 0
    %278 = vmatpush.bf16.msra.mxu0 0
    %279 = vmatpush.bf16.msra.mxu0 0
    %280 = vmatpush.bf16.msra.mxu0 0
    %281 = vmatpush.bf16.msra.mxu0 %v269
    %282 = vmatmul.bf16.gmra.mxu0 %v272
    %v283 = vpop.f32.mrf.mxu0
    %v284 = vadd.f32 0.0, %v283
    %v285 = vpop.f32.mrf.mxu0
    %v286 = vadd.f32 0.0, %v285
    %287 = vdwg.mxu0
    %v288 = vmax.f32 %v88, 1.0
    %v289 = vmax.f32 %v90, 1.0
    %v290 = vmax.f32 %v116, 1.0
    %v291 = vmax.f32 %v118, 1.0
    %v292 = vmax.f32 %v144, 1.0
    %v293 = vmax.f32 %v146, 1.0
    %v294 = vmax.f32 %v172, 1.0
    %v295 = vmax.f32 %v174, 1.0
    %v296 = vmax.f32 %v200, 1.0
    %v297 = vmax.f32 %v202, 1.0
    %v298 = vmax.f32 %v228, 1.0
    %v299 = vmax.f32 %v230, 1.0
    %v300 = vmax.f32 %v256, 1.0
    %v301 = vmax.f32 %v258, 1.0
    %v302 = vmax.f32 %v284, 1.0
    %v303 = vmax.f32 %v286, 1.0
    %v304 = vrcp.pop %v288
    %v305 = vrcp.pop %v289
    %v306 = vrcp.pop %v290
    %v307 = vrcp.pop %v291
    %v308 = vrcp.pop %v292
    %v309 = vrcp.pop %v293
    %v310 = vrcp.pop %v294
    %v311 = vrcp.pop %v295
    %v312 = vrcp.pop %v296
    %v313 = vrcp.pop %v297
    %v314 = vrcp.pop %v298
    %v315 = vrcp.pop %v299
    %v316 = vrcp.pop %v300
    %v317 = vrcp.pop %v301
    %v318 = vrcp.pop %v302
    %v319 = vrcp.pop %v303
    %321 = vset.pattern.permute.xlu0 8
    %322 = vperm.xlu0 %321, %v304
    %v323 = vpop.permute.xlu0 %322
    %326 = vset.pattern.permute.xlu0 8
    %327 = vperm.xlu0 %326, %v305
    %v328 = vpop.permute.xlu0 %327
    %331 = vset.pattern.permute.xlu0 8
    %332 = vperm.xlu0 %331, %v306
    %v333 = vpop.permute.xlu0 %332
    %336 = vset.pattern.permute.xlu0 8
    %337 = vperm.xlu0 %336, %v307
    %v338 = vpop.permute.xlu0 %337
    %341 = vset.pattern.permute.xlu0 8
    %342 = vperm.xlu0 %341, %v308
    %v343 = vpop.permute.xlu0 %342
    %346 = vset.pattern.permute.xlu0 8
    %347 = vperm.xlu0 %346, %v309
    %v348 = vpop.permute.xlu0 %347
    %351 = vset.pattern.permute.xlu0 8
    %352 = vperm.xlu0 %351, %v310
    %v353 = vpop.permute.xlu0 %352
    %356 = vset.pattern.permute.xlu0 8
    %357 = vperm.xlu0 %356, %v311
    %v358 = vpop.permute.xlu0 %357
    %361 = vset.pattern.permute.xlu0 8
    %362 = vperm.xlu0 %361, %v312
    %v363 = vpop.permute.xlu0 %362
    %366 = vset.pattern.permute.xlu0 8
    %367 = vperm.xlu0 %366, %v313
    %v368 = vpop.permute.xlu0 %367
    %371 = vset.pattern.permute.xlu0 8
    %372 = vperm.xlu0 %371, %v314
    %v373 = vpop.permute.xlu0 %372
    %376 = vset.pattern.permute.xlu0 8
    %377 = vperm.xlu0 %376, %v315
    %v378 = vpop.permute.xlu0 %377
    %381 = vset.pattern.permute.xlu0 8
    %382 = vperm.xlu0 %381, %v316
    %v383 = vpop.permute.xlu0 %382
    %386 = vset.pattern.permute.xlu0 8
    %387 = vperm.xlu0 %386, %v317
    %v388 = vpop.permute.xlu0 %387
    %391 = vset.pattern.permute.xlu0 8
    %392 = vperm.xlu0 %391, %v318
    %v393 = vpop.permute.xlu0 %392
    %396 = vset.pattern.permute.xlu0 8
    %397 = vperm.xlu0 %396, %v319
    %v398 = vpop.permute.xlu0 %397
    %v400 = vmul.f32 %v88, %v323
    %v401 = vmul.f32 %v90, %v328
    %v402 = vmul.f32 %v116, %v333
    %v403 = vmul.f32 %v118, %v338
    %v404 = vmul.f32 %v144, %v343
    %v405 = vmul.f32 %v146, %v348
    %v406 = vmul.f32 %v172, %v353
    %v407 = vmul.f32 %v174, %v358
    %v408 = vmul.f32 %v200, %v363
    %v409 = vmul.f32 %v202, %v368
    %v410 = vmul.f32 %v228, %v373
    %v411 = vmul.f32 %v230, %v378
    %v412 = vmul.f32 %v256, %v383
    %v413 = vmul.f32 %v258, %v388
    %v414 = vmul.f32 %v284, %v393
    %v415 = vmul.f32 %v286, %v398
    %v416 = vld [vmem:[%s2] sm:$0xff]
    %v417 = vld [vmem:[%s2 + $0x8] sm:$0x1]
    %v418 = vunpack.c.l.bf16 %v31
    %v419 = vunpack.c.l.bf16 %v32
    %v420 = vunpack.c.l.bf16 %v33
    %v421 = vunpack.c.l.bf16 %v34
    %v422 = vunpack.c.l.bf16 %v35
    %v423 = vunpack.c.l.bf16 %v36
    %v424 = vunpack.c.l.bf16 %v37
    %v425 = vunpack.c.l.bf16 %v38
    %v426 = vunpack.c.l.bf16 %v39
    %v427 = vunpack.c.l.bf16 %v40
    %v428 = vunpack.c.l.bf16 %v41
    %v429 = vunpack.c.l.bf16 %v42
    %v430 = vunpack.c.l.bf16 %v43
    %v431 = vunpack.c.l.bf16 %v44
    %v432 = vunpack.c.l.bf16 %v45
    %v433 = vunpack.c.l.bf16 %v46
    %v434 = vld [vmem:[%s3] sm:$0xff]
    %v435 = vld [vmem:[%s3 + $0x8] sm:$0x1]
    %vm436 = vcmask 72704
    %v438 = vsel %vm436, %v418, 0
    %v441 = vsel %vm436, %v419, 0
    %v444 = vsel %vm436, %v420, 0
    %v447 = vsel %vm436, %v421, 0
    %v450 = vsel %vm436, %v422, 0
    %v453 = vsel %vm436, %v423, 0
    %v456 = vsel %vm436, %v424, 0
    %v459 = vsel %vm436, %v425, 0
    %v462 = vsel %vm436, %v426, 0
    %v465 = vsel %vm436, %v427, 0
    %v468 = vsel %vm436, %v428, 0
    %v471 = vsel %vm436, %v429, 0
    %v474 = vsel %vm436, %v430, 0
    %v477 = vsel %vm436, %v431, 0
    %v480 = vsel %vm436, %v432, 0
    %v483 = vsel %vm436, %v433, 0
    %vm485 = vcmask 1040384
    %v487 = vsel %vm485, %v435, 0
    %489 = vmatpush.msra.mxu0 0.0
    %490 = vmatpush.msra.mxu0 0.0
    %491 = vmatpush.msra.mxu0 0.0
    %492 = vmatpush.msra.mxu0 0.0
    %493 = vmatpush.msra.mxu0 0.0
    %494 = vmatpush.msra.mxu0 0.0
    %495 = vmatpush.msra.mxu0 0.0
    %496 = vmatpush.msra.mxu0 0.0
    %497 = vmatpush.msra.mxu0 0.0
    %498 = vmatpush.msra.mxu0 0.0
    %499 = vmatpush.msra.mxu0 0.0
    %500 = vmatpush.msra.mxu0 0.0
    %501 = vmatpush.msra.mxu0 0.0
    %502 = vmatpush.msra.mxu0 0.0
    %503 = vmatpush.msra.mxu0 %v487
    %504 = vmatpush.msra.mxu0 %v434
    %505 = vmatmul.f32.gmra.mxu0 %v438
    %v506 = vpop.f32.mrf.mxu0
    %v507 = vadd.f32 0.0, %v506
    %508 = vmatmul.f32.gmra.mxu0 %v441
    %v509 = vpop.f32.mrf.mxu0
    %v510 = vadd.f32 0.0, %v509
    %511 = vmatmul.f32.gmra.mxu0 %v444
    %v512 = vpop.f32.mrf.mxu0
    %v513 = vadd.f32 0.0, %v512
    %514 = vmatmul.f32.gmra.mxu0 %v447
    %v515 = vpop.f32.mrf.mxu0
    %v516 = vadd.f32 0.0, %v515
    %517 = vmatmul.f32.gmra.mxu0 %v450
    %v518 = vpop.f32.mrf.mxu0
    %v519 = vadd.f32 0.0, %v518
    %520 = vmatmul.f32.gmra.mxu0 %v453
    %v521 = vpop.f32.mrf.mxu0
    %v522 = vadd.f32 0.0, %v521
    %523 = vmatmul.f32.gmra.mxu0 %v456
    %v524 = vpop.f32.mrf.mxu0
    %v525 = vadd.f32 0.0, %v524
    %526 = vmatmul.f32.gmra.mxu0 %v459
    %v527 = vpop.f32.mrf.mxu0
    %v528 = vadd.f32 0.0, %v527
    %529 = vmatmul.f32.gmra.mxu0 %v462
    %v530 = vpop.f32.mrf.mxu0
    %v531 = vadd.f32 0.0, %v530
    %532 = vmatmul.f32.gmra.mxu0 %v465
    %v533 = vpop.f32.mrf.mxu0
    %v534 = vadd.f32 0.0, %v533
    %535 = vmatmul.f32.gmra.mxu0 %v468
    %v536 = vpop.f32.mrf.mxu0
    %v537 = vadd.f32 0.0, %v536
    %538 = vmatmul.f32.gmra.mxu0 %v471
    %v539 = vpop.f32.mrf.mxu0
    %v540 = vadd.f32 0.0, %v539
    %541 = vmatmul.f32.gmra.mxu0 %v474
    %v542 = vpop.f32.mrf.mxu0
    %v543 = vadd.f32 0.0, %v542
    %544 = vmatmul.f32.gmra.mxu0 %v477
    %v545 = vpop.f32.mrf.mxu0
    %v546 = vadd.f32 0.0, %v545
    %547 = vmatmul.f32.gmra.mxu0 %v480
    %v548 = vpop.f32.mrf.mxu0
    %v549 = vadd.f32 0.0, %v548
    %550 = vmatmul.f32.gmra.mxu0 %v483
    %v551 = vpop.f32.mrf.mxu0
    %v552 = vadd.f32 0.0, %v551
    %553 = vdwg.mxu0
    %v555 = vsel %vm436, %v400, 0
    %v558 = vsel %vm436, %v401, 0
    %v561 = vsel %vm436, %v402, 0
    %v564 = vsel %vm436, %v403, 0
    %v567 = vsel %vm436, %v404, 0
    %v570 = vsel %vm436, %v405, 0
    %v573 = vsel %vm436, %v406, 0
    %v576 = vsel %vm436, %v407, 0
    %v579 = vsel %vm436, %v408, 0
    %v582 = vsel %vm436, %v409, 0
    %v585 = vsel %vm436, %v410, 0
    %v588 = vsel %vm436, %v411, 0
    %v591 = vsel %vm436, %v412, 0
    %v594 = vsel %vm436, %v413, 0
    %v597 = vsel %vm436, %v414, 0
    %v600 = vsel %vm436, %v415, 0
    %v603 = vsel %vm485, %v417, 0
    %605 = vmatpush.msra.mxu0 0.0
    %606 = vmatpush.msra.mxu0 0.0
    %607 = vmatpush.msra.mxu0 0.0
    %608 = vmatpush.msra.mxu0 0.0
    %609 = vmatpush.msra.mxu0 0.0
    %610 = vmatpush.msra.mxu0 0.0
    %611 = vmatpush.msra.mxu0 0.0
    %612 = vmatpush.msra.mxu0 0.0
    %613 = vmatpush.msra.mxu0 0.0
    %614 = vmatpush.msra.mxu0 0.0
    %615 = vmatpush.msra.mxu0 0.0
    %616 = vmatpush.msra.mxu0 0.0
    %617 = vmatpush.msra.mxu0 0.0
    %618 = vmatpush.msra.mxu0 0.0
    %619 = vmatpush.msra.mxu0 %v603
    %620 = vmatpush.msra.mxu0 %v416
    %621 = vmatmul.f32.gmra.mxu0 %v555
    %v622 = vpop.f32.mrf.mxu0
    %v623 = vadd.f32 %v507, %v622
    %624 = vmatmul.f32.gmra.mxu0 %v558
    %v625 = vpop.f32.mrf.mxu0
    %v626 = vadd.f32 %v510, %v625
    %627 = vmatmul.f32.gmra.mxu0 %v561
    %v628 = vpop.f32.mrf.mxu0
    %v629 = vadd.f32 %v513, %v628
    %630 = vmatmul.f32.gmra.mxu0 %v564
    %v631 = vpop.f32.mrf.mxu0
    %v632 = vadd.f32 %v516, %v631
    %633 = vmatmul.f32.gmra.mxu0 %v567
    %v634 = vpop.f32.mrf.mxu0
    %v635 = vadd.f32 %v519, %v634
    %636 = vmatmul.f32.gmra.mxu0 %v570
    %v637 = vpop.f32.mrf.mxu0
    %v638 = vadd.f32 %v522, %v637
    %639 = vmatmul.f32.gmra.mxu0 %v573
    %v640 = vpop.f32.mrf.mxu0
    %v641 = vadd.f32 %v525, %v640
    %642 = vmatmul.f32.gmra.mxu0 %v576
    %v643 = vpop.f32.mrf.mxu0
    %v644 = vadd.f32 %v528, %v643
    %645 = vmatmul.f32.gmra.mxu0 %v579
    %v646 = vpop.f32.mrf.mxu0
    %v647 = vadd.f32 %v531, %v646
    %648 = vmatmul.f32.gmra.mxu0 %v582
    %v649 = vpop.f32.mrf.mxu0
    %v650 = vadd.f32 %v534, %v649
    %651 = vmatmul.f32.gmra.mxu0 %v585
    %v652 = vpop.f32.mrf.mxu0
    %v653 = vadd.f32 %v537, %v652
    %654 = vmatmul.f32.gmra.mxu0 %v588
    %v655 = vpop.f32.mrf.mxu0
    %v656 = vadd.f32 %v540, %v655
    %657 = vmatmul.f32.gmra.mxu0 %v591
    %v658 = vpop.f32.mrf.mxu0
    %v659 = vadd.f32 %v543, %v658
    %660 = vmatmul.f32.gmra.mxu0 %v594
    %v661 = vpop.f32.mrf.mxu0
    %v662 = vadd.f32 %v546, %v661
    %663 = vmatmul.f32.gmra.mxu0 %v597
    %v664 = vpop.f32.mrf.mxu0
    %v665 = vadd.f32 %v549, %v664
    %666 = vmatmul.f32.gmra.mxu0 %v600
    %v667 = vpop.f32.mrf.mxu0
    %v668 = vadd.f32 %v552, %v667
    %669 = vdwg.mxu0
    %v670 = vmax.f32 %v623, 0.0
    %v671 = vmax.f32 %v626, 0.0
    %v672 = vmax.f32 %v629, 0.0
    %v673 = vmax.f32 %v632, 0.0
    %v674 = vmax.f32 %v635, 0.0
    %v675 = vmax.f32 %v638, 0.0
    %v676 = vmax.f32 %v641, 0.0
    %v677 = vmax.f32 %v644, 0.0
    %v678 = vmax.f32 %v647, 0.0
    %v679 = vmax.f32 %v650, 0.0
    %v680 = vmax.f32 %v653, 0.0
    %v681 = vmax.f32 %v656, 0.0
    %v682 = vmax.f32 %v659, 0.0
    %v683 = vmax.f32 %v662, 0.0
    %v684 = vmax.f32 %v665, 0.0
    %v685 = vmax.f32 %v668, 0.0
    %v686 = vld [vmem:[%s4] sm:$0xff]
    %v687 = vld [vmem:[%s4 + $0x8] sm:$0xff]
    %v688 = vld [vmem:[%s4 + $0x10] sm:$0xff]
    %v689 = vld [vmem:[%s4 + $0x18] sm:$0xff]
    %v690 = vld [vmem:[%s4 + $0x20] sm:$0xff]
    %v691 = vld [vmem:[%s4 + $0x28] sm:$0xff]
    %v692 = vld [vmem:[%s4 + $0x30] sm:$0xff]
    %v693 = vld [vmem:[%s4 + $0x38] sm:$0xff]
    %v694 = vld [vmem:[%s4 + $0x40] sm:$0xff]
    %v695 = vld [vmem:[%s4 + $0x48] sm:$0xff]
    %v696 = vld [vmem:[%s4 + $0x50] sm:$0xff]
    %v697 = vld [vmem:[%s4 + $0x58] sm:$0xff]
    %v698 = vld [vmem:[%s4 + $0x60] sm:$0xff]
    %v699 = vld [vmem:[%s4 + $0x68] sm:$0xff]
    %v700 = vld [vmem:[%s4 + $0x70] sm:$0xff]
    %v701 = vld [vmem:[%s4 + $0x78] sm:$0xff]
    %v702 = vld [vmem:[%s5] sm:$0x1]
    %v704 = vperm.slane %v702, 0
    %706 = vmatpush.msra.mxu0 %v701
    %707 = vmatpush.msra.mxu0 %v700
    %708 = vmatpush.msra.mxu0 %v699
    %709 = vmatpush.msra.mxu0 %v698
    %710 = vmatpush.msra.mxu0 %v697
    %711 = vmatpush.msra.mxu0 %v696
    %712 = vmatpush.msra.mxu0 %v695
    %713 = vmatpush.msra.mxu0 %v694
    %714 = vmatpush.msra.mxu0 %v693
    %715 = vmatpush.msra.mxu0 %v692
    %716 = vmatpush.msra.mxu0 %v691
    %717 = vmatpush.msra.mxu0 %v690
    %718 = vmatpush.msra.mxu0 %v689
    %719 = vmatpush.msra.mxu0 %v688
    %720 = vmatpush.msra.mxu0 %v687
    %721 = vmatpush.msra.mxu0 %v686
    %722 = vmatmul.f32.gmra.mxu0 %v670
    %v723 = vpop.f32.mrf.mxu0
    %v724 = vadd.f32 %v704, %v723
    %725 = vmatmul.f32.gmra.mxu0 %v671
    %v726 = vpop.f32.mrf.mxu0
    %v727 = vadd.f32 %v704, %v726
    %728 = vmatmul.f32.gmra.mxu0 %v672
    %v729 = vpop.f32.mrf.mxu0
    %v730 = vadd.f32 %v704, %v729
    %731 = vmatmul.f32.gmra.mxu0 %v673
    %v732 = vpop.f32.mrf.mxu0
    %v733 = vadd.f32 %v704, %v732
    %734 = vmatmul.f32.gmra.mxu0 %v674
    %v735 = vpop.f32.mrf.mxu0
    %v736 = vadd.f32 %v704, %v735
    %737 = vmatmul.f32.gmra.mxu0 %v675
    %v738 = vpop.f32.mrf.mxu0
    %v739 = vadd.f32 %v704, %v738
    %740 = vmatmul.f32.gmra.mxu0 %v676
    %v741 = vpop.f32.mrf.mxu0
    %v742 = vadd.f32 %v704, %v741
    %743 = vmatmul.f32.gmra.mxu0 %v677
    %v744 = vpop.f32.mrf.mxu0
    %v745 = vadd.f32 %v704, %v744
    %746 = vmatmul.f32.gmra.mxu0 %v678
    %v747 = vpop.f32.mrf.mxu0
    %v748 = vadd.f32 %v704, %v747
    %749 = vmatmul.f32.gmra.mxu0 %v679
    %v750 = vpop.f32.mrf.mxu0
    %v751 = vadd.f32 %v704, %v750
    %752 = vmatmul.f32.gmra.mxu0 %v680
    %v753 = vpop.f32.mrf.mxu0
    %v754 = vadd.f32 %v704, %v753
    %755 = vmatmul.f32.gmra.mxu0 %v681
    %v756 = vpop.f32.mrf.mxu0
    %v757 = vadd.f32 %v704, %v756
    %758 = vmatmul.f32.gmra.mxu0 %v682
    %v759 = vpop.f32.mrf.mxu0
    %v760 = vadd.f32 %v704, %v759
    %761 = vmatmul.f32.gmra.mxu0 %v683
    %v762 = vpop.f32.mrf.mxu0
    %v763 = vadd.f32 %v704, %v762
    %764 = vmatmul.f32.gmra.mxu0 %v684
    %v765 = vpop.f32.mrf.mxu0
    %v766 = vadd.f32 %v704, %v765
    %767 = vmatmul.f32.gmra.mxu0 %v685
    %v768 = vpop.f32.mrf.mxu0
    %v769 = vadd.f32 %v704, %v768
    %770 = vdwg.mxu0
    %vm771 = vcmask 64512
    %v772 = vsel %vm771, %v724, -inf
    %v773 = vsel %vm771, %v727, -inf
    %v774 = vmax.f32 %v772, %v773
    %v775 = vrot.slane %v774, 4
    %v776 = vmax.f32 %v774, %v775
    %v777 = vrot.slane %v776, 2
    %v778 = vmax.f32 %v776, %v777
    %v779 = vrot.slane %v778, 1
    %v780 = vmax.f32 %v778, %v779
    %v781 = vsel %vm771, %v730, -inf
    %v782 = vsel %vm771, %v733, -inf
    %v783 = vmax.f32 %v781, %v782
    %v784 = vrot.slane %v783, 4
    %v785 = vmax.f32 %v783, %v784
    %v786 = vrot.slane %v785, 2
    %v787 = vmax.f32 %v785, %v786
    %v788 = vrot.slane %v787, 1
    %v789 = vmax.f32 %v787, %v788
    %v790 = vsel %vm771, %v736, -inf
    %v791 = vsel %vm771, %v739, -inf
    %v792 = vmax.f32 %v790, %v791
    %v793 = vrot.slane %v792, 4
    %v794 = vmax.f32 %v792, %v793
    %v795 = vrot.slane %v794, 2
    %v796 = vmax.f32 %v794, %v795
    %v797 = vrot.slane %v796, 1
    %v798 = vmax.f32 %v796, %v797
    %v799 = vsel %vm771, %v742, -inf
    %v800 = vsel %vm771, %v745, -inf
    %v801 = vmax.f32 %v799, %v800
    %v802 = vrot.slane %v801, 4
    %v803 = vmax.f32 %v801, %v802
    %v804 = vrot.slane %v803, 2
    %v805 = vmax.f32 %v803, %v804
    %v806 = vrot.slane %v805, 1
    %v807 = vmax.f32 %v805, %v806
    %v808 = vsel %vm771, %v748, -inf
    %v809 = vsel %vm771, %v751, -inf
    %v810 = vmax.f32 %v808, %v809
    %v811 = vrot.slane %v810, 4
    %v812 = vmax.f32 %v810, %v811
    %v813 = vrot.slane %v812, 2
    %v814 = vmax.f32 %v812, %v813
    %v815 = vrot.slane %v814, 1
    %v816 = vmax.f32 %v814, %v815
    %v817 = vsel %vm771, %v754, -inf
    %v818 = vsel %vm771, %v757, -inf
    %v819 = vmax.f32 %v817, %v818
    %v820 = vrot.slane %v819, 4
    %v821 = vmax.f32 %v819, %v820
    %v822 = vrot.slane %v821, 2
    %v823 = vmax.f32 %v821, %v822
    %v824 = vrot.slane %v823, 1
    %v825 = vmax.f32 %v823, %v824
    %v826 = vsel %vm771, %v760, -inf
    %v827 = vsel %vm771, %v763, -inf
    %v828 = vmax.f32 %v826, %v827
    %v829 = vrot.slane %v828, 4
    %v830 = vmax.f32 %v828, %v829
    %v831 = vrot.slane %v830, 2
    %v832 = vmax.f32 %v830, %v831
    %v833 = vrot.slane %v832, 1
    %v834 = vmax.f32 %v832, %v833
    %v835 = vsel %vm771, %v766, -inf
    %v836 = vsel %vm771, %v769, -inf
    %v837 = vmax.f32 %v835, %v836
    %v838 = vrot.slane %v837, 4
    %v839 = vmax.f32 %v837, %v838
    %v840 = vrot.slane %v839, 2
    %v841 = vmax.f32 %v839, %v840
    %v842 = vrot.slane %v841, 1
    %v843 = vmax.f32 %v841, %v842
    %v844 = vsub.f32 %v724, %v780
    %v845 = vsub.f32 %v727, %v780
    %v846 = vsub.f32 %v730, %v789
    %v847 = vsub.f32 %v733, %v789
    %v848 = vsub.f32 %v736, %v798
    %v849 = vsub.f32 %v739, %v798
    %v850 = vsub.f32 %v742, %v807
    %v851 = vsub.f32 %v745, %v807
    %v852 = vsub.f32 %v748, %v816
    %v853 = vsub.f32 %v751, %v816
    %v854 = vsub.f32 %v754, %v825
    %v855 = vsub.f32 %v757, %v825
    %v856 = vsub.f32 %v760, %v834
    %v857 = vsub.f32 %v763, %v834
    %v858 = vsub.f32 %v766, %v843
    %v859 = vsub.f32 %v769, %v843
    %v860 = vmul.f32 %v844, 1.442695
    %v861 = vpow.pop %v860
    %v862 = vmul.f32 %v845, 1.442695
    %v863 = vpow.pop %v862
    %v864 = vmul.f32 %v846, 1.442695
    %v865 = vpow.pop %v864
    %v866 = vmul.f32 %v847, 1.442695
    %v867 = vpow.pop %v866
    %v868 = vmul.f32 %v848, 1.442695
    %v869 = vpow.pop %v868
    %v870 = vmul.f32 %v849, 1.442695
    %v871 = vpow.pop %v870
    %v872 = vmul.f32 %v850, 1.442695
    %v873 = vpow.pop %v872
    %v874 = vmul.f32 %v851, 1.442695
    %v875 = vpow.pop %v874
    %v876 = vmul.f32 %v852, 1.442695
    %v877 = vpow.pop %v876
    %v878 = vmul.f32 %v853, 1.442695
    %v879 = vpow.pop %v878
    %v880 = vmul.f32 %v854, 1.442695
    %v881 = vpow.pop %v880
    %v882 = vmul.f32 %v855, 1.442695
    %v883 = vpow.pop %v882
    %v884 = vmul.f32 %v856, 1.442695
    %v885 = vpow.pop %v884
    %v886 = vmul.f32 %v857, 1.442695
    %v887 = vpow.pop %v886
    %v888 = vmul.f32 %v858, 1.442695
    %v889 = vpow.pop %v888
    %v890 = vmul.f32 %v859, 1.442695
    %v891 = vpow.pop %v890
    %v892 = vsel %vm771, %v861, 0.0
    %v893 = vsel %vm771, %v863, 0.0
    %v894 = vadd.f32 %v892, %v893
    %v895 = vrot.slane %v894, 4
    %v896 = vadd.f32 %v894, %v895
    %v897 = vrot.slane %v896, 2
    %v898 = vadd.f32 %v896, %v897
    %v899 = vrot.slane %v898, 1
    %v900 = vadd.f32 %v898, %v899
    %v901 = vsel %vm771, %v865, 0.0
    %v902 = vsel %vm771, %v867, 0.0
    %v903 = vadd.f32 %v901, %v902
    %v904 = vrot.slane %v903, 4
    %v905 = vadd.f32 %v903, %v904
    %v906 = vrot.slane %v905, 2
    %v907 = vadd.f32 %v905, %v906
    %v908 = vrot.slane %v907, 1
    %v909 = vadd.f32 %v907, %v908
    %v910 = vsel %vm771, %v869, 0.0
    %v911 = vsel %vm771, %v871, 0.0
    %v912 = vadd.f32 %v910, %v911
    %v913 = vrot.slane %v912, 4
    %v914 = vadd.f32 %v912, %v913
    %v915 = vrot.slane %v914, 2
    %v916 = vadd.f32 %v914, %v915
    %v917 = vrot.slane %v916, 1
    %v918 = vadd.f32 %v916, %v917
    %v919 = vsel %vm771, %v873, 0.0
    %v920 = vsel %vm771, %v875, 0.0
    %v921 = vadd.f32 %v919, %v920
    %v922 = vrot.slane %v921, 4
    %v923 = vadd.f32 %v921, %v922
    %v924 = vrot.slane %v923, 2
    %v925 = vadd.f32 %v923, %v924
    %v926 = vrot.slane %v925, 1
    %v927 = vadd.f32 %v925, %v926
    %v928 = vsel %vm771, %v877, 0.0
    %v929 = vsel %vm771, %v879, 0.0
    %v930 = vadd.f32 %v928, %v929
    %v931 = vrot.slane %v930, 4
    %v932 = vadd.f32 %v930, %v931
    %v933 = vrot.slane %v932, 2
    %v934 = vadd.f32 %v932, %v933
    %v935 = vrot.slane %v934, 1
    %v936 = vadd.f32 %v934, %v935
    %v937 = vsel %vm771, %v881, 0.0
    %v938 = vsel %vm771, %v883, 0.0
    %v939 = vadd.f32 %v937, %v938
    %v940 = vrot.slane %v939, 4
    %v941 = vadd.f32 %v939, %v940
    %v942 = vrot.slane %v941, 2
    %v943 = vadd.f32 %v941, %v942
    %v944 = vrot.slane %v943, 1
    %v945 = vadd.f32 %v943, %v944
    %v946 = vsel %vm771, %v885, 0.0
    %v947 = vsel %vm771, %v887, 0.0
    %v948 = vadd.f32 %v946, %v947
    %v949 = vrot.slane %v948, 4
    %v950 = vadd.f32 %v948, %v949
    %v951 = vrot.slane %v950, 2
    %v952 = vadd.f32 %v950, %v951
    %v953 = vrot.slane %v952, 1
    %v954 = vadd.f32 %v952, %v953
    %v955 = vsel %vm771, %v889, 0.0
    %v956 = vsel %vm771, %v891, 0.0
    %v957 = vadd.f32 %v955, %v956
    %v958 = vrot.slane %v957, 4
    %v959 = vadd.f32 %v957, %v958
    %v960 = vrot.slane %v959, 2
    %v961 = vadd.f32 %v959, %v960
    %v962 = vrot.slane %v961, 1
    %v963 = vadd.f32 %v961, %v962
    %v964 = vrcp.pop %v900
    %v965 = vmul.f32 %v900, %v964
    %v966 = vsub.f32 1.0, %v965
    %v967 = vmul.f32 %v964, %v966
    %v968 = vadd.f32 %v964, %v967
    %vm969 = vweird.f32 %v900
    %vm970 = vweird.f32 %v964
    %vm971 = vmor %vm969, %vm970
    %v972 = vsel %vm971, %v964, %v968
    %v973 = vand.u32 2147483647, %v900
    %vm974 = vcmp.eq.f32.partialorder %v973, 8.507059e+37
    %v975 = vand.u32 %v900, 2147483648
    %v976 = vor.u32 1.1754944e-38, %v975
    %v977 = vsel %vm974, %v976, %v972
    %v978 = vmul.f32 %v861, %v977
    %v979 = vmul.f32 %v863, %v977
    %v980 = vrcp.pop %v909
    %v981 = vmul.f32 %v909, %v980
    %v982 = vsub.f32 1.0, %v981
    %v983 = vmul.f32 %v980, %v982
    %v984 = vadd.f32 %v980, %v983
    %vm985 = vweird.f32 %v909
    %vm986 = vweird.f32 %v980
    %vm987 = vmor %vm985, %vm986
    %v988 = vsel %vm987, %v980, %v984
    %v989 = vand.u32 2147483647, %v909
    %vm990 = vcmp.eq.f32.partialorder %v989, 8.507059e+37
    %v991 = vand.u32 %v909, 2147483648
    %v992 = vor.u32 1.1754944e-38, %v991
    %v993 = vsel %vm990, %v992, %v988
    %v994 = vmul.f32 %v865, %v993
    %v995 = vmul.f32 %v867, %v993
    %v996 = vrcp.pop %v918
    %v997 = vmul.f32 %v918, %v996
    %v998 = vsub.f32 1.0, %v997
    %v999 = vmul.f32 %v996, %v998
    %v1000 = vadd.f32 %v996, %v999
    %vm1001 = vweird.f32 %v918
    %vm1002 = vweird.f32 %v996
    %vm1003 = vmor %vm1001, %vm1002
    %v1004 = vsel %vm1003, %v996, %v1000
    %v1005 = vand.u32 2147483647, %v918
    %vm1006 = vcmp.eq.f32.partialorder %v1005, 8.507059e+37
    %v1007 = vand.u32 %v918, 2147483648
    %v1008 = vor.u32 1.1754944e-38, %v1007
    %v1009 = vsel %vm1006, %v1008, %v1004
    %v1010 = vmul.f32 %v869, %v1009
    %v1011 = vmul.f32 %v871, %v1009
    %v1012 = vrcp.pop %v927
    %v1013 = vmul.f32 %v927, %v1012
    %v1014 = vsub.f32 1.0, %v1013
    %v1015 = vmul.f32 %v1012, %v1014
    %v1016 = vadd.f32 %v1012, %v1015
    %vm1017 = vweird.f32 %v927
    %vm1018 = vweird.f32 %v1012
    %vm1019 = vmor %vm1017, %vm1018
    %v1020 = vsel %vm1019, %v1012, %v1016
    %v1021 = vand.u32 2147483647, %v927
    %vm1022 = vcmp.eq.f32.partialorder %v1021, 8.507059e+37
    %v1023 = vand.u32 %v927, 2147483648
    %v1024 = vor.u32 1.1754944e-38, %v1023
    %v1025 = vsel %vm1022, %v1024, %v1020
    %v1026 = vmul.f32 %v873, %v1025
    %v1027 = vmul.f32 %v875, %v1025
    %v1028 = vrcp.pop %v936
    %v1029 = vmul.f32 %v936, %v1028
    %v1030 = vsub.f32 1.0, %v1029
    %v1031 = vmul.f32 %v1028, %v1030
    %v1032 = vadd.f32 %v1028, %v1031
    %vm1033 = vweird.f32 %v936
    %vm1034 = vweird.f32 %v1028
    %vm1035 = vmor %vm1033, %vm1034
    %v1036 = vsel %vm1035, %v1028, %v1032
    %v1037 = vand.u32 2147483647, %v936
    %vm1038 = vcmp.eq.f32.partialorder %v1037, 8.507059e+37
    %v1039 = vand.u32 %v936, 2147483648
    %v1040 = vor.u32 1.1754944e-38, %v1039
    %v1041 = vsel %vm1038, %v1040, %v1036
    %v1042 = vmul.f32 %v877, %v1041
    %v1043 = vmul.f32 %v879, %v1041
    %v1044 = vrcp.pop %v945
    %v1045 = vmul.f32 %v945, %v1044
    %v1046 = vsub.f32 1.0, %v1045
    %v1047 = vmul.f32 %v1044, %v1046
    %v1048 = vadd.f32 %v1044, %v1047
    %vm1049 = vweird.f32 %v945
    %vm1050 = vweird.f32 %v1044
    %vm1051 = vmor %vm1049, %vm1050
    %v1052 = vsel %vm1051, %v1044, %v1048
    %v1053 = vand.u32 2147483647, %v945
    %vm1054 = vcmp.eq.f32.partialorder %v1053, 8.507059e+37
    %v1055 = vand.u32 %v945, 2147483648
    %v1056 = vor.u32 1.1754944e-38, %v1055
    %v1057 = vsel %vm1054, %v1056, %v1052
    %v1058 = vmul.f32 %v881, %v1057
    %v1059 = vmul.f32 %v883, %v1057
    %v1060 = vrcp.pop %v954
    %v1061 = vmul.f32 %v954, %v1060
    %v1062 = vsub.f32 1.0, %v1061
    %v1063 = vmul.f32 %v1060, %v1062
    %v1064 = vadd.f32 %v1060, %v1063
    %vm1065 = vweird.f32 %v954
    %vm1066 = vweird.f32 %v1060
    %vm1067 = vmor %vm1065, %vm1066
    %v1068 = vsel %vm1067, %v1060, %v1064
    %v1069 = vand.u32 2147483647, %v954
    %vm1070 = vcmp.eq.f32.partialorder %v1069, 8.507059e+37
    %v1071 = vand.u32 %v954, 2147483648
    %v1072 = vor.u32 1.1754944e-38, %v1071
    %v1073 = vsel %vm1070, %v1072, %v1068
    %v1074 = vmul.f32 %v885, %v1073
    %v1075 = vmul.f32 %v887, %v1073
    %v1076 = vrcp.pop %v963
    %v1077 = vmul.f32 %v963, %v1076
    %v1078 = vsub.f32 1.0, %v1077
    %v1079 = vmul.f32 %v1076, %v1078
    %v1080 = vadd.f32 %v1076, %v1079
    %vm1081 = vweird.f32 %v963
    %vm1082 = vweird.f32 %v1076
    %vm1083 = vmor %vm1081, %vm1082
    %v1084 = vsel %vm1083, %v1076, %v1080
    %v1085 = vand.u32 2147483647, %v963
    %vm1086 = vcmp.eq.f32.partialorder %v1085, 8.507059e+37
    %v1087 = vand.u32 %v963, 2147483648
    %v1088 = vor.u32 1.1754944e-38, %v1087
    %v1089 = vsel %vm1086, %v1088, %v1084
    %v1090 = vmul.f32 %v889, %v1089
    %v1091 = vmul.f32 %v891, %v1089
    %v1092 = vsel %vm771, %v978, -inf
    %1093 = vmax.xlane.f32.xlu0 %v1092
    %v1094 = vpop.xlane.xlu0 %1093
    %v1095 = vsel %vm771, %v979, -inf
    %1096 = vmax.xlane.f32.xlu0 %v1095
    %v1097 = vpop.xlane.xlu0 %1096
    %v1098 = vsel %vm771, %v994, -inf
    %1099 = vmax.xlane.f32.xlu0 %v1098
    %v1100 = vpop.xlane.xlu0 %1099
    %v1101 = vsel %vm771, %v995, -inf
    %1102 = vmax.xlane.f32.xlu0 %v1101
    %v1103 = vpop.xlane.xlu0 %1102
    %v1104 = vsel %vm771, %v1010, -inf
    %1105 = vmax.xlane.f32.xlu0 %v1104
    %v1106 = vpop.xlane.xlu0 %1105
    %v1107 = vsel %vm771, %v1011, -inf
    %1108 = vmax.xlane.f32.xlu0 %v1107
    %v1109 = vpop.xlane.xlu0 %1108
    %v1110 = vsel %vm771, %v1026, -inf
    %1111 = vmax.xlane.f32.xlu0 %v1110
    %v1112 = vpop.xlane.xlu0 %1111
    %v1113 = vsel %vm771, %v1027, -inf
    %1114 = vmax.xlane.f32.xlu0 %v1113
    %v1115 = vpop.xlane.xlu0 %1114
    %v1116 = vsel %vm771, %v1042, -inf
    %1117 = vmax.xlane.f32.xlu0 %v1116
    %v1118 = vpop.xlane.xlu0 %1117
    %v1119 = vsel %vm771, %v1043, -inf
    %1120 = vmax.xlane.f32.xlu0 %v1119
    %v1121 = vpop.xlane.xlu0 %1120
    %v1122 = vsel %vm771, %v1058, -inf
    %1123 = vmax.xlane.f32.xlu0 %v1122
    %v1124 = vpop.xlane.xlu0 %1123
    %v1125 = vsel %vm771, %v1059, -inf
    %1126 = vmax.xlane.f32.xlu0 %v1125
    %v1127 = vpop.xlane.xlu0 %1126
    %v1128 = vsel %vm771, %v1074, -inf
    %1129 = vmax.xlane.f32.xlu0 %v1128
    %v1130 = vpop.xlane.xlu0 %1129
    %v1131 = vsel %vm771, %v1075, -inf
    %1132 = vmax.xlane.f32.xlu0 %v1131
    %v1133 = vpop.xlane.xlu0 %1132
    %v1134 = vsel %vm771, %v1090, -inf
    %1135 = vmax.xlane.f32.xlu0 %v1134
    %v1136 = vpop.xlane.xlu0 %1135
    %v1137 = vsel %vm771, %v1091, -inf
    %1138 = vmax.xlane.f32.xlu0 %v1137
    %v1139 = vpop.xlane.xlu0 %1138
    %v1140 = vsub.f32 %v978, %v1094
    %v1141 = vsub.f32 %v979, %v1097
    %v1142 = vsub.f32 %v994, %v1100
    %v1143 = vsub.f32 %v995, %v1103
    %v1144 = vsub.f32 %v1010, %v1106
    %v1145 = vsub.f32 %v1011, %v1109
    %v1146 = vsub.f32 %v1026, %v1112
    %v1147 = vsub.f32 %v1027, %v1115
    %v1148 = vsub.f32 %v1042, %v1118
    %v1149 = vsub.f32 %v1043, %v1121
    %v1150 = vsub.f32 %v1058, %v1124
    %v1151 = vsub.f32 %v1059, %v1127
    %v1152 = vsub.f32 %v1074, %v1130
    %v1153 = vsub.f32 %v1075, %v1133
    %v1154 = vsub.f32 %v1090, %v1136
    %v1155 = vsub.f32 %v1091, %v1139
    %v1156 = vmul.f32 %v1140, 1.442695
    %v1157 = vpow.pop %v1156
    %v1158 = vmul.f32 %v1141, 1.442695
    %v1159 = vpow.pop %v1158
    %v1160 = vmul.f32 %v1142, 1.442695
    %v1161 = vpow.pop %v1160
    %v1162 = vmul.f32 %v1143, 1.442695
    %v1163 = vpow.pop %v1162
    %v1164 = vmul.f32 %v1144, 1.442695
    %v1165 = vpow.pop %v1164
    %v1166 = vmul.f32 %v1145, 1.442695
    %v1167 = vpow.pop %v1166
    %v1168 = vmul.f32 %v1146, 1.442695
    %v1169 = vpow.pop %v1168
    %v1170 = vmul.f32 %v1147, 1.442695
    %v1171 = vpow.pop %v1170
    %v1172 = vmul.f32 %v1148, 1.442695
    %v1173 = vpow.pop %v1172
    %v1174 = vmul.f32 %v1149, 1.442695
    %v1175 = vpow.pop %v1174
    %v1176 = vmul.f32 %v1150, 1.442695
    %v1177 = vpow.pop %v1176
    %v1178 = vmul.f32 %v1151, 1.442695
    %v1179 = vpow.pop %v1178
    %v1180 = vmul.f32 %v1152, 1.442695
    %v1181 = vpow.pop %v1180
    %v1182 = vmul.f32 %v1153, 1.442695
    %v1183 = vpow.pop %v1182
    %v1184 = vmul.f32 %v1154, 1.442695
    %v1185 = vpow.pop %v1184
    %v1186 = vmul.f32 %v1155, 1.442695
    %v1187 = vpow.pop %v1186
    %v1188 = vsel %vm771, %v1157, 0.0
    %1189 = vadd.xlane.f32.xlu0 %v1188
    %v1190 = vpop.xlane.xlu0 %1189
    %v1191 = vsel %vm771, %v1159, 0.0
    %1192 = vadd.xlane.f32.xlu0 %v1191
    %v1193 = vpop.xlane.xlu0 %1192
    %v1194 = vsel %vm771, %v1161, 0.0
    %1195 = vadd.xlane.f32.xlu0 %v1194
    %v1196 = vpop.xlane.xlu0 %1195
    %v1197 = vsel %vm771, %v1163, 0.0
    %1198 = vadd.xlane.f32.xlu0 %v1197
    %v1199 = vpop.xlane.xlu0 %1198
    %v1200 = vsel %vm771, %v1165, 0.0
    %1201 = vadd.xlane.f32.xlu0 %v1200
    %v1202 = vpop.xlane.xlu0 %1201
    %v1203 = vsel %vm771, %v1167, 0.0
    %1204 = vadd.xlane.f32.xlu0 %v1203
    %v1205 = vpop.xlane.xlu0 %1204
    %v1206 = vsel %vm771, %v1169, 0.0
    %1207 = vadd.xlane.f32.xlu0 %v1206
    %v1208 = vpop.xlane.xlu0 %1207
    %v1209 = vsel %vm771, %v1171, 0.0
    %1210 = vadd.xlane.f32.xlu0 %v1209
    %v1211 = vpop.xlane.xlu0 %1210
    %v1212 = vsel %vm771, %v1173, 0.0
    %1213 = vadd.xlane.f32.xlu0 %v1212
    %v1214 = vpop.xlane.xlu0 %1213
    %v1215 = vsel %vm771, %v1175, 0.0
    %1216 = vadd.xlane.f32.xlu0 %v1215
    %v1217 = vpop.xlane.xlu0 %1216
    %v1218 = vsel %vm771, %v1177, 0.0
    %1219 = vadd.xlane.f32.xlu0 %v1218
    %v1220 = vpop.xlane.xlu0 %1219
    %v1221 = vsel %vm771, %v1179, 0.0
    %1222 = vadd.xlane.f32.xlu0 %v1221
    %v1223 = vpop.xlane.xlu0 %1222
    %v1224 = vsel %vm771, %v1181, 0.0
    %1225 = vadd.xlane.f32.xlu0 %v1224
    %v1226 = vpop.xlane.xlu0 %1225
    %v1227 = vsel %vm771, %v1183, 0.0
    %1228 = vadd.xlane.f32.xlu0 %v1227
    %v1229 = vpop.xlane.xlu0 %1228
    %v1230 = vsel %vm771, %v1185, 0.0
    %1231 = vadd.xlane.f32.xlu0 %v1230
    %v1232 = vpop.xlane.xlu0 %1231
    %v1233 = vsel %vm771, %v1187, 0.0
    %1234 = vadd.xlane.f32.xlu0 %v1233
    %v1235 = vpop.xlane.xlu0 %1234
    %v1236 = vrcp.pop %v1190
    %v1237 = vmul.f32 %v1190, %v1236
    %v1238 = vsub.f32 1.0, %v1237
    %v1239 = vmul.f32 %v1236, %v1238
    %v1240 = vadd.f32 %v1236, %v1239
    %vm1241 = vweird.f32 %v1190
    %vm1242 = vweird.f32 %v1236
    %vm1243 = vmor %vm1241, %vm1242
    %v1244 = vsel %vm1243, %v1236, %v1240
    %v1245 = vand.u32 2147483647, %v1190
    %vm1246 = vcmp.eq.f32.partialorder %v1245, 8.507059e+37
    %v1247 = vand.u32 %v1190, 2147483648
    %v1248 = vor.u32 1.1754944e-38, %v1247
    %v1249 = vsel %vm1246, %v1248, %v1244
    %v1250 = vmul.f32 %v1157, %v1249
    %v1251 = vrcp.pop %v1193
    %v1252 = vmul.f32 %v1193, %v1251
    %v1253 = vsub.f32 1.0, %v1252
    %v1254 = vmul.f32 %v1251, %v1253
    %v1255 = vadd.f32 %v1251, %v1254
    %vm1256 = vweird.f32 %v1193
    %vm1257 = vweird.f32 %v1251
    %vm1258 = vmor %vm1256, %vm1257
    %v1259 = vsel %vm1258, %v1251, %v1255
    %v1260 = vand.u32 2147483647, %v1193
    %vm1261 = vcmp.eq.f32.partialorder %v1260, 8.507059e+37
    %v1262 = vand.u32 %v1193, 2147483648
    %v1263 = vor.u32 1.1754944e-38, %v1262
    %v1264 = vsel %vm1261, %v1263, %v1259
    %v1265 = vmul.f32 %v1159, %v1264
    %v1266 = vrcp.pop %v1196
    %v1267 = vmul.f32 %v1196, %v1266
    %v1268 = vsub.f32 1.0, %v1267
    %v1269 = vmul.f32 %v1266, %v1268
    %v1270 = vadd.f32 %v1266, %v1269
    %vm1271 = vweird.f32 %v1196
    %vm1272 = vweird.f32 %v1266
    %vm1273 = vmor %vm1271, %vm1272
    %v1274 = vsel %vm1273, %v1266, %v1270
    %v1275 = vand.u32 2147483647, %v1196
    %vm1276 = vcmp.eq.f32.partialorder %v1275, 8.507059e+37
    %v1277 = vand.u32 %v1196, 2147483648
    %v1278 = vor.u32 1.1754944e-38, %v1277
    %v1279 = vsel %vm1276, %v1278, %v1274
    %v1280 = vmul.f32 %v1161, %v1279
    %v1281 = vrcp.pop %v1199
    %v1282 = vmul.f32 %v1199, %v1281
    %v1283 = vsub.f32 1.0, %v1282
    %v1284 = vmul.f32 %v1281, %v1283
    %v1285 = vadd.f32 %v1281, %v1284
    %vm1286 = vweird.f32 %v1199
    %vm1287 = vweird.f32 %v1281
    %vm1288 = vmor %vm1286, %vm1287
    %v1289 = vsel %vm1288, %v1281, %v1285
    %v1290 = vand.u32 2147483647, %v1199
    %vm1291 = vcmp.eq.f32.partialorder %v1290, 8.507059e+37
    %v1292 = vand.u32 %v1199, 2147483648
    %v1293 = vor.u32 1.1754944e-38, %v1292
    %v1294 = vsel %vm1291, %v1293, %v1289
    %v1295 = vmul.f32 %v1163, %v1294
    %v1296 = vrcp.pop %v1202
    %v1297 = vmul.f32 %v1202, %v1296
    %v1298 = vsub.f32 1.0, %v1297
    %v1299 = vmul.f32 %v1296, %v1298
    %v1300 = vadd.f32 %v1296, %v1299
    %vm1301 = vweird.f32 %v1202
    %vm1302 = vweird.f32 %v1296
    %vm1303 = vmor %vm1301, %vm1302
    %v1304 = vsel %vm1303, %v1296, %v1300
    %v1305 = vand.u32 2147483647, %v1202
    %vm1306 = vcmp.eq.f32.partialorder %v1305, 8.507059e+37
    %v1307 = vand.u32 %v1202, 2147483648
    %v1308 = vor.u32 1.1754944e-38, %v1307
    %v1309 = vsel %vm1306, %v1308, %v1304
    %v1310 = vmul.f32 %v1165, %v1309
    %v1311 = vrcp.pop %v1205
    %v1312 = vmul.f32 %v1205, %v1311
    %v1313 = vsub.f32 1.0, %v1312
    %v1314 = vmul.f32 %v1311, %v1313
    %v1315 = vadd.f32 %v1311, %v1314
    %vm1316 = vweird.f32 %v1205
    %vm1317 = vweird.f32 %v1311
    %vm1318 = vmor %vm1316, %vm1317
    %v1319 = vsel %vm1318, %v1311, %v1315
    %v1320 = vand.u32 2147483647, %v1205
    %vm1321 = vcmp.eq.f32.partialorder %v1320, 8.507059e+37
    %v1322 = vand.u32 %v1205, 2147483648
    %v1323 = vor.u32 1.1754944e-38, %v1322
    %v1324 = vsel %vm1321, %v1323, %v1319
    %v1325 = vmul.f32 %v1167, %v1324
    %v1326 = vrcp.pop %v1208
    %v1327 = vmul.f32 %v1208, %v1326
    %v1328 = vsub.f32 1.0, %v1327
    %v1329 = vmul.f32 %v1326, %v1328
    %v1330 = vadd.f32 %v1326, %v1329
    %vm1331 = vweird.f32 %v1208
    %vm1332 = vweird.f32 %v1326
    %vm1333 = vmor %vm1331, %vm1332
    %v1334 = vsel %vm1333, %v1326, %v1330
    %v1335 = vand.u32 2147483647, %v1208
    %vm1336 = vcmp.eq.f32.partialorder %v1335, 8.507059e+37
    %v1337 = vand.u32 %v1208, 2147483648
    %v1338 = vor.u32 1.1754944e-38, %v1337
    %v1339 = vsel %vm1336, %v1338, %v1334
    %v1340 = vmul.f32 %v1169, %v1339
    %v1341 = vrcp.pop %v1211
    %v1342 = vmul.f32 %v1211, %v1341
    %v1343 = vsub.f32 1.0, %v1342
    %v1344 = vmul.f32 %v1341, %v1343
    %v1345 = vadd.f32 %v1341, %v1344
    %vm1346 = vweird.f32 %v1211
    %vm1347 = vweird.f32 %v1341
    %vm1348 = vmor %vm1346, %vm1347
    %v1349 = vsel %vm1348, %v1341, %v1345
    %v1350 = vand.u32 2147483647, %v1211
    %vm1351 = vcmp.eq.f32.partialorder %v1350, 8.507059e+37
    %v1352 = vand.u32 %v1211, 2147483648
    %v1353 = vor.u32 1.1754944e-38, %v1352
    %v1354 = vsel %vm1351, %v1353, %v1349
    %v1355 = vmul.f32 %v1171, %v1354
    %v1356 = vrcp.pop %v1214
    %v1357 = vmul.f32 %v1214, %v1356
    %v1358 = vsub.f32 1.0, %v1357
    %v1359 = vmul.f32 %v1356, %v1358
    %v1360 = vadd.f32 %v1356, %v1359
    %vm1361 = vweird.f32 %v1214
    %vm1362 = vweird.f32 %v1356
    %vm1363 = vmor %vm1361, %vm1362
    %v1364 = vsel %vm1363, %v1356, %v1360
    %v1365 = vand.u32 2147483647, %v1214
    %vm1366 = vcmp.eq.f32.partialorder %v1365, 8.507059e+37
    %v1367 = vand.u32 %v1214, 2147483648
    %v1368 = vor.u32 1.1754944e-38, %v1367
    %v1369 = vsel %vm1366, %v1368, %v1364
    %v1370 = vmul.f32 %v1173, %v1369
    %v1371 = vrcp.pop %v1217
    %v1372 = vmul.f32 %v1217, %v1371
    %v1373 = vsub.f32 1.0, %v1372
    %v1374 = vmul.f32 %v1371, %v1373
    %v1375 = vadd.f32 %v1371, %v1374
    %vm1376 = vweird.f32 %v1217
    %vm1377 = vweird.f32 %v1371
    %vm1378 = vmor %vm1376, %vm1377
    %v1379 = vsel %vm1378, %v1371, %v1375
    %v1380 = vand.u32 2147483647, %v1217
    %vm1381 = vcmp.eq.f32.partialorder %v1380, 8.507059e+37
    %v1382 = vand.u32 %v1217, 2147483648
    %v1383 = vor.u32 1.1754944e-38, %v1382
    %v1384 = vsel %vm1381, %v1383, %v1379
    %v1385 = vmul.f32 %v1175, %v1384
    %v1386 = vrcp.pop %v1220
    %v1387 = vmul.f32 %v1220, %v1386
    %v1388 = vsub.f32 1.0, %v1387
    %v1389 = vmul.f32 %v1386, %v1388
    %v1390 = vadd.f32 %v1386, %v1389
    %vm1391 = vweird.f32 %v1220
    %vm1392 = vweird.f32 %v1386
    %vm1393 = vmor %vm1391, %vm1392
    %v1394 = vsel %vm1393, %v1386, %v1390
    %v1395 = vand.u32 2147483647, %v1220
    %vm1396 = vcmp.eq.f32.partialorder %v1395, 8.507059e+37
    %v1397 = vand.u32 %v1220, 2147483648
    %v1398 = vor.u32 1.1754944e-38, %v1397
    %v1399 = vsel %vm1396, %v1398, %v1394
    %v1400 = vmul.f32 %v1177, %v1399
    %v1401 = vrcp.pop %v1223
    %v1402 = vmul.f32 %v1223, %v1401
    %v1403 = vsub.f32 1.0, %v1402
    %v1404 = vmul.f32 %v1401, %v1403
    %v1405 = vadd.f32 %v1401, %v1404
    %vm1406 = vweird.f32 %v1223
    %vm1407 = vweird.f32 %v1401
    %vm1408 = vmor %vm1406, %vm1407
    %v1409 = vsel %vm1408, %v1401, %v1405
    %v1410 = vand.u32 2147483647, %v1223
    %vm1411 = vcmp.eq.f32.partialorder %v1410, 8.507059e+37
    %v1412 = vand.u32 %v1223, 2147483648
    %v1413 = vor.u32 1.1754944e-38, %v1412
    %v1414 = vsel %vm1411, %v1413, %v1409
    %v1415 = vmul.f32 %v1179, %v1414
    %v1416 = vrcp.pop %v1226
    %v1417 = vmul.f32 %v1226, %v1416
    %v1418 = vsub.f32 1.0, %v1417
    %v1419 = vmul.f32 %v1416, %v1418
    %v1420 = vadd.f32 %v1416, %v1419
    %vm1421 = vweird.f32 %v1226
    %vm1422 = vweird.f32 %v1416
    %vm1423 = vmor %vm1421, %vm1422
    %v1424 = vsel %vm1423, %v1416, %v1420
    %v1425 = vand.u32 2147483647, %v1226
    %vm1426 = vcmp.eq.f32.partialorder %v1425, 8.507059e+37
    %v1427 = vand.u32 %v1226, 2147483648
    %v1428 = vor.u32 1.1754944e-38, %v1427
    %v1429 = vsel %vm1426, %v1428, %v1424
    %v1430 = vmul.f32 %v1181, %v1429
    %v1431 = vrcp.pop %v1229
    %v1432 = vmul.f32 %v1229, %v1431
    %v1433 = vsub.f32 1.0, %v1432
    %v1434 = vmul.f32 %v1431, %v1433
    %v1435 = vadd.f32 %v1431, %v1434
    %vm1436 = vweird.f32 %v1229
    %vm1437 = vweird.f32 %v1431
    %vm1438 = vmor %vm1436, %vm1437
    %v1439 = vsel %vm1438, %v1431, %v1435
    %v1440 = vand.u32 2147483647, %v1229
    %vm1441 = vcmp.eq.f32.partialorder %v1440, 8.507059e+37
    %v1442 = vand.u32 %v1229, 2147483648
    %v1443 = vor.u32 1.1754944e-38, %v1442
    %v1444 = vsel %vm1441, %v1443, %v1439
    %v1445 = vmul.f32 %v1183, %v1444
    %v1446 = vrcp.pop %v1232
    %v1447 = vmul.f32 %v1232, %v1446
    %v1448 = vsub.f32 1.0, %v1447
    %v1449 = vmul.f32 %v1446, %v1448
    %v1450 = vadd.f32 %v1446, %v1449
    %vm1451 = vweird.f32 %v1232
    %vm1452 = vweird.f32 %v1446
    %vm1453 = vmor %vm1451, %vm1452
    %v1454 = vsel %vm1453, %v1446, %v1450
    %v1455 = vand.u32 2147483647, %v1232
    %vm1456 = vcmp.eq.f32.partialorder %v1455, 8.507059e+37
    %v1457 = vand.u32 %v1232, 2147483648
    %v1458 = vor.u32 1.1754944e-38, %v1457
    %v1459 = vsel %vm1456, %v1458, %v1454
    %v1460 = vmul.f32 %v1185, %v1459
    %v1461 = vrcp.pop %v1235
    %v1462 = vmul.f32 %v1235, %v1461
    %v1463 = vsub.f32 1.0, %v1462
    %v1464 = vmul.f32 %v1461, %v1463
    %v1465 = vadd.f32 %v1461, %v1464
    %vm1466 = vweird.f32 %v1235
    %vm1467 = vweird.f32 %v1461
    %vm1468 = vmor %vm1466, %vm1467
    %v1469 = vsel %vm1468, %v1461, %v1465
    %v1470 = vand.u32 2147483647, %v1235
    %vm1471 = vcmp.eq.f32.partialorder %v1470, 8.507059e+37
    %v1472 = vand.u32 %v1235, 2147483648
    %v1473 = vor.u32 1.1754944e-38, %v1472
    %v1474 = vsel %vm1471, %v1473, %v1469
    %v1475 = vmul.f32 %v1187, %v1474
    %1476 = vxpose.xlu0.b32.start [1/16] %v1250, 128
    %1477 = vxpose.xlu0.b32.cont [2/16] %v1265, 128
    %1478 = vxpose.xlu0.b32.cont [3/16] 0.0, 128
    %1479 = vxpose.xlu0.b32.cont [4/16] 0.0, 128
    %1480 = vxpose.xlu0.b32.cont [5/16] 0.0, 128
    %1481 = vxpose.xlu0.b32.cont [6/16] 0.0, 128
    %1482 = vxpose.xlu0.b32.cont [7/16] 0.0, 128
    %1483 = vxpose.xlu0.b32.cont [8/16] 0.0, 128
    %1484 = vxpose.xlu0.b32.cont [9/16] 0.0, 128
    %1485 = vxpose.xlu0.b32.cont [10/16] 0.0, 128
    %1486 = vxpose.xlu0.b32.cont [11/16] 0.0, 128
    %1487 = vxpose.xlu0.b32.cont [12/16] 0.0, 128
    %1488 = vxpose.xlu0.b32.cont [13/16] 0.0, 128
    %1489 = vxpose.xlu0.b32.cont [14/16] 0.0, 128
    %1490 = vxpose.xlu0.b32.cont [15/16] 0.0, 128
    %1491 = vxpose.xlu0.b32.end [16/16] 0.0, 128
    %v1492 = vpop.trf.xlu0
    %v1493 = vpop.trf.xlu0
    %v1494 = vpop.trf.xlu0
    %v1495 = vpop.trf.xlu0
    %v1496 = vpop.trf.xlu0
    %v1497 = vpop.trf.xlu0
    %v1498 = vpop.trf.xlu0
    %v1499 = vpop.trf.xlu0
    %v1500 = vpop.trf.xlu0
    %v1501 = vpop.trf.xlu0
    %v1502 = vpop.trf.xlu0
    %v1503 = vpop.trf.xlu0
    %v1504 = vpop.trf.xlu0
    %v1505 = vpop.trf.xlu0
    %v1506 = vpop.trf.xlu0
    %v1507 = vpop.trf.xlu0
    %v1509 = vsel %vm74, %v1492, 0
    %1511 = vmatpush.msra.mxu0 0.0
    %1512 = vmatpush.msra.mxu0 0.0
    %1513 = vmatpush.msra.mxu0 0.0
    %1514 = vmatpush.msra.mxu0 0.0
    %1515 = vmatpush.msra.mxu0 0.0
    %1516 = vmatpush.msra.mxu0 0.0
    %1517 = vmatpush.msra.mxu0 0.0
    %1518 = vmatpush.msra.mxu0 0.0
    %1519 = vmatpush.msra.mxu0 0.0
    %1520 = vmatpush.msra.mxu0 0.0
    %1521 = vmatpush.msra.mxu0 0.0
    %1522 = vmatpush.msra.mxu0 0.0
    %1523 = vmatpush.msra.mxu0 0.0
    %1524 = vmatpush.msra.mxu0 0.0
    %1525 = vmatpush.msra.mxu0 %v671
    %1526 = vmatpush.msra.mxu0 %v670
    %1527 = vmatmul.f32.gmra.mxu0 %v1509
    %v1528 = vpop.f32.mrf.mxu0
    %v1529 = vadd.f32 0.0, %v1528
    %1530 = vdwg.mxu0
    %1531 = vxpose.xlu0.b32.start [1/16] %v1280, 128
    %1532 = vxpose.xlu0.b32.cont [2/16] %v1295, 128
    %1533 = vxpose.xlu0.b32.cont [3/16] 0.0, 128
    %1534 = vxpose.xlu0.b32.cont [4/16] 0.0, 128
    %1535 = vxpose.xlu0.b32.cont [5/16] 0.0, 128
    %1536 = vxpose.xlu0.b32.cont [6/16] 0.0, 128
    %1537 = vxpose.xlu0.b32.cont [7/16] 0.0, 128
    %1538 = vxpose.xlu0.b32.cont [8/16] 0.0, 128
    %1539 = vxpose.xlu0.b32.cont [9/16] 0.0, 128
    %1540 = vxpose.xlu0.b32.cont [10/16] 0.0, 128
    %1541 = vxpose.xlu0.b32.cont [11/16] 0.0, 128
    %1542 = vxpose.xlu0.b32.cont [12/16] 0.0, 128
    %1543 = vxpose.xlu0.b32.cont [13/16] 0.0, 128
    %1544 = vxpose.xlu0.b32.cont [14/16] 0.0, 128
    %1545 = vxpose.xlu0.b32.cont [15/16] 0.0, 128
    %1546 = vxpose.xlu0.b32.end [16/16] 0.0, 128
    %v1547 = vpop.trf.xlu0
    %v1548 = vpop.trf.xlu0
    %v1549 = vpop.trf.xlu0
    %v1550 = vpop.trf.xlu0
    %v1551 = vpop.trf.xlu0
    %v1552 = vpop.trf.xlu0
    %v1553 = vpop.trf.xlu0
    %v1554 = vpop.trf.xlu0
    %v1555 = vpop.trf.xlu0
    %v1556 = vpop.trf.xlu0
    %v1557 = vpop.trf.xlu0
    %v1558 = vpop.trf.xlu0
    %v1559 = vpop.trf.xlu0
    %v1560 = vpop.trf.xlu0
    %v1561 = vpop.trf.xlu0
    %v1562 = vpop.trf.xlu0
    %v1564 = vsel %vm74, %v1547, 0
    %1566 = vmatpush.msra.mxu0 0.0
    %1567 = vmatpush.msra.mxu0 0.0
    %1568 = vmatpush.msra.mxu0 0.0
    %1569 = vmatpush.msra.mxu0 0.0
    %1570 = vmatpush.msra.mxu0 0.0
    %1571 = vmatpush.msra.mxu0 0.0
    %1572 = vmatpush.msra.mxu0 0.0
    %1573 = vmatpush.msra.mxu0 0.0
    %1574 = vmatpush.msra.mxu0 0.0
    %1575 = vmatpush.msra.mxu0 0.0
    %1576 = vmatpush.msra.mxu0 0.0
    %1577 = vmatpush.msra.mxu0 0.0
    %1578 = vmatpush.msra.mxu0 0.0
    %1579 = vmatpush.msra.mxu0 0.0
    %1580 = vmatpush.msra.mxu0 %v673
    %1581 = vmatpush.msra.mxu0 %v672
    %1582 = vmatmul.f32.gmra.mxu0 %v1564
    %v1583 = vpop.f32.mrf.mxu0
    %v1584 = vadd.f32 0.0, %v1583
    %1585 = vdwg.mxu0
    %1586 = vxpose.xlu0.b32.start [1/16] %v1310, 128
    %1587 = vxpose.xlu0.b32.cont [2/16] %v1325, 128
    %1588 = vxpose.xlu0.b32.cont [3/16] 0.0, 128
    %1589 = vxpose.xlu0.b32.cont [4/16] 0.0, 128
    %1590 = vxpose.xlu0.b32.cont [5/16] 0.0, 128
    %1591 = vxpose.xlu0.b32.cont [6/16] 0.0, 128
    %1592 = vxpose.xlu0.b32.cont [7/16] 0.0, 128
    %1593 = vxpose.xlu0.b32.cont [8/16] 0.0, 128
    %1594 = vxpose.xlu0.b32.cont [9/16] 0.0, 128
    %1595 = vxpose.xlu0.b32.cont [10/16] 0.0, 128
    %1596 = vxpose.xlu0.b32.cont [11/16] 0.0, 128
    %1597 = vxpose.xlu0.b32.cont [12/16] 0.0, 128
    %1598 = vxpose.xlu0.b32.cont [13/16] 0.0, 128
    %1599 = vxpose.xlu0.b32.cont [14/16] 0.0, 128
    %1600 = vxpose.xlu0.b32.cont [15/16] 0.0, 128
    %1601 = vxpose.xlu0.b32.end [16/16] 0.0, 128
    %v1602 = vpop.trf.xlu0
    %v1603 = vpop.trf.xlu0
    %v1604 = vpop.trf.xlu0
    %v1605 = vpop.trf.xlu0
    %v1606 = vpop.trf.xlu0
    %v1607 = vpop.trf.xlu0
    %v1608 = vpop.trf.xlu0
    %v1609 = vpop.trf.xlu0
    %v1610 = vpop.trf.xlu0
    %v1611 = vpop.trf.xlu0
    %v1612 = vpop.trf.xlu0
    %v1613 = vpop.trf.xlu0
    %v1614 = vpop.trf.xlu0
    %v1615 = vpop.trf.xlu0
    %v1616 = vpop.trf.xlu0
    %v1617 = vpop.trf.xlu0
    %v1619 = vsel %vm74, %v1602, 0
    %1621 = vmatpush.msra.mxu0 0.0
    %1622 = vmatpush.msra.mxu0 0.0
    %1623 = vmatpush.msra.mxu0 0.0
    %1624 = vmatpush.msra.mxu0 0.0
    %1625 = vmatpush.msra.mxu0 0.0
    %1626 = vmatpush.msra.mxu0 0.0
    %1627 = vmatpush.msra.mxu0 0.0
    %1628 = vmatpush.msra.mxu0 0.0
    %1629 = vmatpush.msra.mxu0 0.0
    %1630 = vmatpush.msra.mxu0 0.0
    %1631 = vmatpush.msra.mxu0 0.0
    %1632 = vmatpush.msra.mxu0 0.0
    %1633 = vmatpush.msra.mxu0 0.0
    %1634 = vmatpush.msra.mxu0 0.0
    %1635 = vmatpush.msra.mxu0 %v675
    %1636 = vmatpush.msra.mxu0 %v674
    %1637 = vmatmul.f32.gmra.mxu0 %v1619
    %v1638 = vpop.f32.mrf.mxu0
    %v1639 = vadd.f32 0.0, %v1638
    %1640 = vdwg.mxu0
    %1641 = vxpose.xlu0.b32.start [1/16] %v1340, 128
    %1642 = vxpose.xlu0.b32.cont [2/16] %v1355, 128
    %1643 = vxpose.xlu0.b32.cont [3/16] 0.0, 128
    %1644 = vxpose.xlu0.b32.cont [4/16] 0.0, 128
    %1645 = vxpose.xlu0.b32.cont [5/16] 0.0, 128
    %1646 = vxpose.xlu0.b32.cont [6/16] 0.0, 128
    %1647 = vxpose.xlu0.b32.cont [7/16] 0.0, 128
    %1648 = vxpose.xlu0.b32.cont [8/16] 0.0, 128
    %1649 = vxpose.xlu0.b32.cont [9/16] 0.0, 128
    %1650 = vxpose.xlu0.b32.cont [10/16] 0.0, 128
    %1651 = vxpose.xlu0.b32.cont [11/16] 0.0, 128
    %1652 = vxpose.xlu0.b32.cont [12/16] 0.0, 128
    %1653 = vxpose.xlu0.b32.cont [13/16] 0.0, 128
    %1654 = vxpose.xlu0.b32.cont [14/16] 0.0, 128
    %1655 = vxpose.xlu0.b32.cont [15/16] 0.0, 128
    %1656 = vxpose.xlu0.b32.end [16/16] 0.0, 128
    %v1657 = vpop.trf.xlu0
    %v1658 = vpop.trf.xlu0
    %v1659 = vpop.trf.xlu0
    %v1660 = vpop.trf.xlu0
    %v1661 = vpop.trf.xlu0
    %v1662 = vpop.trf.xlu0
    %v1663 = vpop.trf.xlu0
    %v1664 = vpop.trf.xlu0
    %v1665 = vpop.trf.xlu0
    %v1666 = vpop.trf.xlu0
    %v1667 = vpop.trf.xlu0
    %v1668 = vpop.trf.xlu0
    %v1669 = vpop.trf.xlu0
    %v1670 = vpop.trf.xlu0
    %v1671 = vpop.trf.xlu0
    %v1672 = vpop.trf.xlu0
    %v1674 = vsel %vm74, %v1657, 0
    %1676 = vmatpush.msra.mxu0 0.0
    %1677 = vmatpush.msra.mxu0 0.0
    %1678 = vmatpush.msra.mxu0 0.0
    %1679 = vmatpush.msra.mxu0 0.0
    %1680 = vmatpush.msra.mxu0 0.0
    %1681 = vmatpush.msra.mxu0 0.0
    %1682 = vmatpush.msra.mxu0 0.0
    %1683 = vmatpush.msra.mxu0 0.0
    %1684 = vmatpush.msra.mxu0 0.0
    %1685 = vmatpush.msra.mxu0 0.0
    %1686 = vmatpush.msra.mxu0 0.0
    %1687 = vmatpush.msra.mxu0 0.0
    %1688 = vmatpush.msra.mxu0 0.0
    %1689 = vmatpush.msra.mxu0 0.0
    %1690 = vmatpush.msra.mxu0 %v677
    %1691 = vmatpush.msra.mxu0 %v676
    %1692 = vmatmul.f32.gmra.mxu0 %v1674
    %v1693 = vpop.f32.mrf.mxu0
    %v1694 = vadd.f32 0.0, %v1693
    %1695 = vdwg.mxu0
    %1696 = vxpose.xlu0.b32.start [1/16] %v1370, 128
    %1697 = vxpose.xlu0.b32.cont [2/16] %v1385, 128
    %1698 = vxpose.xlu0.b32.cont [3/16] 0.0, 128
    %1699 = vxpose.xlu0.b32.cont [4/16] 0.0, 128
    %1700 = vxpose.xlu0.b32.cont [5/16] 0.0, 128
    %1701 = vxpose.xlu0.b32.cont [6/16] 0.0, 128
    %1702 = vxpose.xlu0.b32.cont [7/16] 0.0, 128
    %1703 = vxpose.xlu0.b32.cont [8/16] 0.0, 128
    %1704 = vxpose.xlu0.b32.cont [9/16] 0.0, 128
    %1705 = vxpose.xlu0.b32.cont [10/16] 0.0, 128
    %1706 = vxpose.xlu0.b32.cont [11/16] 0.0, 128
    %1707 = vxpose.xlu0.b32.cont [12/16] 0.0, 128
    %1708 = vxpose.xlu0.b32.cont [13/16] 0.0, 128
    %1709 = vxpose.xlu0.b32.cont [14/16] 0.0, 128
    %1710 = vxpose.xlu0.b32.cont [15/16] 0.0, 128
    %1711 = vxpose.xlu0.b32.end [16/16] 0.0, 128
    %v1712 = vpop.trf.xlu0
    %v1713 = vpop.trf.xlu0
    %v1714 = vpop.trf.xlu0
    %v1715 = vpop.trf.xlu0
    %v1716 = vpop.trf.xlu0
    %v1717 = vpop.trf.xlu0
    %v1718 = vpop.trf.xlu0
    %v1719 = vpop.trf.xlu0
    %v1720 = vpop.trf.xlu0
    %v1721 = vpop.trf.xlu0
    %v1722 = vpop.trf.xlu0
    %v1723 = vpop.trf.xlu0
    %v1724 = vpop.trf.xlu0
    %v1725 = vpop.trf.xlu0
    %v1726 = vpop.trf.xlu0
    %v1727 = vpop.trf.xlu0
    %v1729 = vsel %vm74, %v1712, 0
    %1731 = vmatpush.msra.mxu0 0.0
    %1732 = vmatpush.msra.mxu0 0.0
    %1733 = vmatpush.msra.mxu0 0.0
    %1734 = vmatpush.msra.mxu0 0.0
    %1735 = vmatpush.msra.mxu0 0.0
    %1736 = vmatpush.msra.mxu0 0.0
    %1737 = vmatpush.msra.mxu0 0.0
    %1738 = vmatpush.msra.mxu0 0.0
    %1739 = vmatpush.msra.mxu0 0.0
    %1740 = vmatpush.msra.mxu0 0.0
    %1741 = vmatpush.msra.mxu0 0.0
    %1742 = vmatpush.msra.mxu0 0.0
    %1743 = vmatpush.msra.mxu0 0.0
    %1744 = vmatpush.msra.mxu0 0.0
    %1745 = vmatpush.msra.mxu0 %v679
    %1746 = vmatpush.msra.mxu0 %v678
    %1747 = vmatmul.f32.gmra.mxu0 %v1729
    %v1748 = vpop.f32.mrf.mxu0
    %v1749 = vadd.f32 0.0, %v1748
    %1750 = vdwg.mxu0
    %1751 = vxpose.xlu0.b32.start [1/16] %v1400, 128
    %1752 = vxpose.xlu0.b32.cont [2/16] %v1415, 128
    %1753 = vxpose.xlu0.b32.cont [3/16] 0.0, 128
    %1754 = vxpose.xlu0.b32.cont [4/16] 0.0, 128
    %1755 = vxpose.xlu0.b32.cont [5/16] 0.0, 128
    %1756 = vxpose.xlu0.b32.cont [6/16] 0.0, 128
    %1757 = vxpose.xlu0.b32.cont [7/16] 0.0, 128
    %1758 = vxpose.xlu0.b32.cont [8/16] 0.0, 128
    %1759 = vxpose.xlu0.b32.cont [9/16] 0.0, 128
    %1760 = vxpose.xlu0.b32.cont [10/16] 0.0, 128
    %1761 = vxpose.xlu0.b32.cont [11/16] 0.0, 128
    %1762 = vxpose.xlu0.b32.cont [12/16] 0.0, 128
    %1763 = vxpose.xlu0.b32.cont [13/16] 0.0, 128
    %1764 = vxpose.xlu0.b32.cont [14/16] 0.0, 128
    %1765 = vxpose.xlu0.b32.cont [15/16] 0.0, 128
    %1766 = vxpose.xlu0.b32.end [16/16] 0.0, 128
    %v1767 = vpop.trf.xlu0
    %v1768 = vpop.trf.xlu0
    %v1769 = vpop.trf.xlu0
    %v1770 = vpop.trf.xlu0
    %v1771 = vpop.trf.xlu0
    %v1772 = vpop.trf.xlu0
    %v1773 = vpop.trf.xlu0
    %v1774 = vpop.trf.xlu0
    %v1775 = vpop.trf.xlu0
    %v1776 = vpop.trf.xlu0
    %v1777 = vpop.trf.xlu0
    %v1778 = vpop.trf.xlu0
    %v1779 = vpop.trf.xlu0
    %v1780 = vpop.trf.xlu0
    %v1781 = vpop.trf.xlu0
    %v1782 = vpop.trf.xlu0
    %v1784 = vsel %vm74, %v1767, 0
    %1786 = vmatpush.msra.mxu0 0.0
    %1787 = vmatpush.msra.mxu0 0.0
    %1788 = vmatpush.msra.mxu0 0.0
    %1789 = vmatpush.msra.mxu0 0.0
    %1790 = vmatpush.msra.mxu0 0.0
    %1791 = vmatpush.msra.mxu0 0.0
    %1792 = vmatpush.msra.mxu0 0.0
    %1793 = vmatpush.msra.mxu0 0.0
    %1794 = vmatpush.msra.mxu0 0.0
    %1795 = vmatpush.msra.mxu0 0.0
    %1796 = vmatpush.msra.mxu0 0.0
    %1797 = vmatpush.msra.mxu0 0.0
    %1798 = vmatpush.msra.mxu0 0.0
    %1799 = vmatpush.msra.mxu0 0.0
    %1800 = vmatpush.msra.mxu0 %v681
    %1801 = vmatpush.msra.mxu0 %v680
    %1802 = vmatmul.f32.gmra.mxu0 %v1784
    %v1803 = vpop.f32.mrf.mxu0
    %v1804 = vadd.f32 0.0, %v1803
    %1805 = vdwg.mxu0
    %1806 = vxpose.xlu0.b32.start [1/16] %v1430, 128
    %1807 = vxpose.xlu0.b32.cont [2/16] %v1445, 128
    %1808 = vxpose.xlu0.b32.cont [3/16] 0.0, 128
    %1809 = vxpose.xlu0.b32.cont [4/16] 0.0, 128
    %1810 = vxpose.xlu0.b32.cont [5/16] 0.0, 128
    %1811 = vxpose.xlu0.b32.cont [6/16] 0.0, 128
    %1812 = vxpose.xlu0.b32.cont [7/16] 0.0, 128
    %1813 = vxpose.xlu0.b32.cont [8/16] 0.0, 128
    %1814 = vxpose.xlu0.b32.cont [9/16] 0.0, 128
    %1815 = vxpose.xlu0.b32.cont [10/16] 0.0, 128
    %1816 = vxpose.xlu0.b32.cont [11/16] 0.0, 128
    %1817 = vxpose.xlu0.b32.cont [12/16] 0.0, 128
    %1818 = vxpose.xlu0.b32.cont [13/16] 0.0, 128
    %1819 = vxpose.xlu0.b32.cont [14/16] 0.0, 128
    %1820 = vxpose.xlu0.b32.cont [15/16] 0.0, 128
    %1821 = vxpose.xlu0.b32.end [16/16] 0.0, 128
    %v1822 = vpop.trf.xlu0
    %v1823 = vpop.trf.xlu0
    %v1824 = vpop.trf.xlu0
    %v1825 = vpop.trf.xlu0
    %v1826 = vpop.trf.xlu0
    %v1827 = vpop.trf.xlu0
    %v1828 = vpop.trf.xlu0
    %v1829 = vpop.trf.xlu0
    %v1830 = vpop.trf.xlu0
    %v1831 = vpop.trf.xlu0
    %v1832 = vpop.trf.xlu0
    %v1833 = vpop.trf.xlu0
    %v1834 = vpop.trf.xlu0
    %v1835 = vpop.trf.xlu0
    %v1836 = vpop.trf.xlu0
    %v1837 = vpop.trf.xlu0
    %v1839 = vsel %vm74, %v1822, 0
    %1841 = vmatpush.msra.mxu0 0.0
    %1842 = vmatpush.msra.mxu0 0.0
    %1843 = vmatpush.msra.mxu0 0.0
    %1844 = vmatpush.msra.mxu0 0.0
    %1845 = vmatpush.msra.mxu0 0.0
    %1846 = vmatpush.msra.mxu0 0.0
    %1847 = vmatpush.msra.mxu0 0.0
    %1848 = vmatpush.msra.mxu0 0.0
    %1849 = vmatpush.msra.mxu0 0.0
    %1850 = vmatpush.msra.mxu0 0.0
    %1851 = vmatpush.msra.mxu0 0.0
    %1852 = vmatpush.msra.mxu0 0.0
    %1853 = vmatpush.msra.mxu0 0.0
    %1854 = vmatpush.msra.mxu0 0.0
    %1855 = vmatpush.msra.mxu0 %v683
    %1856 = vmatpush.msra.mxu0 %v682
    %1857 = vmatmul.f32.gmra.mxu0 %v1839
    %v1858 = vpop.f32.mrf.mxu0
    %v1859 = vadd.f32 0.0, %v1858
    %1860 = vdwg.mxu0
    %1861 = vxpose.xlu0.b32.start [1/16] %v1460, 128
    %1862 = vxpose.xlu0.b32.cont [2/16] %v1475, 128
    %1863 = vxpose.xlu0.b32.cont [3/16] 0.0, 128
    %1864 = vxpose.xlu0.b32.cont [4/16] 0.0, 128
    %1865 = vxpose.xlu0.b32.cont [5/16] 0.0, 128
    %1866 = vxpose.xlu0.b32.cont [6/16] 0.0, 128
    %1867 = vxpose.xlu0.b32.cont [7/16] 0.0, 128
    %1868 = vxpose.xlu0.b32.cont [8/16] 0.0, 128
    %1869 = vxpose.xlu0.b32.cont [9/16] 0.0, 128
    %1870 = vxpose.xlu0.b32.cont [10/16] 0.0, 128
    %1871 = vxpose.xlu0.b32.cont [11/16] 0.0, 128
    %1872 = vxpose.xlu0.b32.cont [12/16] 0.0, 128
    %1873 = vxpose.xlu0.b32.cont [13/16] 0.0, 128
    %1874 = vxpose.xlu0.b32.cont [14/16] 0.0, 128
    %1875 = vxpose.xlu0.b32.cont [15/16] 0.0, 128
    %1876 = vxpose.xlu0.b32.end [16/16] 0.0, 128
    %v1877 = vpop.trf.xlu0
    %v1878 = vpop.trf.xlu0
    %v1879 = vpop.trf.xlu0
    %v1880 = vpop.trf.xlu0
    %v1881 = vpop.trf.xlu0
    %v1882 = vpop.trf.xlu0
    %v1883 = vpop.trf.xlu0
    %v1884 = vpop.trf.xlu0
    %v1885 = vpop.trf.xlu0
    %v1886 = vpop.trf.xlu0
    %v1887 = vpop.trf.xlu0
    %v1888 = vpop.trf.xlu0
    %v1889 = vpop.trf.xlu0
    %v1890 = vpop.trf.xlu0
    %v1891 = vpop.trf.xlu0
    %v1892 = vpop.trf.xlu0
    %v1894 = vsel %vm74, %v1877, 0
    %1896 = vmatpush.msra.mxu0 0.0
    %1897 = vmatpush.msra.mxu0 0.0
    %1898 = vmatpush.msra.mxu0 0.0
    %1899 = vmatpush.msra.mxu0 0.0
    %1900 = vmatpush.msra.mxu0 0.0
    %1901 = vmatpush.msra.mxu0 0.0
    %1902 = vmatpush.msra.mxu0 0.0
    %1903 = vmatpush.msra.mxu0 0.0
    %1904 = vmatpush.msra.mxu0 0.0
    %1905 = vmatpush.msra.mxu0 0.0
    %1906 = vmatpush.msra.mxu0 0.0
    %1907 = vmatpush.msra.mxu0 0.0
    %1908 = vmatpush.msra.mxu0 0.0
    %1909 = vmatpush.msra.mxu0 0.0
    %1910 = vmatpush.msra.mxu0 %v685
    %1911 = vmatpush.msra.mxu0 %v684
    %1912 = vmatmul.f32.gmra.mxu0 %v1894
    %v1913 = vpop.f32.mrf.mxu0
    %v1914 = vadd.f32 0.0, %v1913
    %1915 = vdwg.mxu0
    %1916 = vst [vmem:[#allocation2] sm:$0xff] %v1529
    %1917 = vst [vmem:[#allocation2 + $0x8] sm:$0xff] %v1584
    %1918 = vst [vmem:[#allocation2 + $0x10] sm:$0xff] %v1639
    %1919 = vst [vmem:[#allocation2 + $0x18] sm:$0xff] %v1694
    %1920 = vst [vmem:[#allocation2 + $0x20] sm:$0xff] %v1749
    %1921 = vst [vmem:[#allocation2 + $0x28] sm:$0xff] %v1804
    %1922 = vst [vmem:[#allocation2 + $0x30] sm:$0xff] %v1859
    %1923 = vst [vmem:[#allocation2 + $0x38] sm:$0xff] %v1914
    %v1924 = vpack.c.bf16 %v1250, %v1250
    %v1925 = vpack.c.bf16 %v1265, %v1265
    %v1926 = vpack.c.bf16 %v1280, %v1280
    %v1927 = vpack.c.bf16 %v1295, %v1295
    %v1928 = vpack.c.bf16 %v1310, %v1310
    %v1929 = vpack.c.bf16 %v1325, %v1325
    %v1930 = vpack.c.bf16 %v1340, %v1340
    %v1931 = vpack.c.bf16 %v1355, %v1355
    %v1932 = vpack.c.bf16 %v1370, %v1370
    %v1933 = vpack.c.bf16 %v1385, %v1385
    %v1934 = vpack.c.bf16 %v1400, %v1400
    %v1935 = vpack.c.bf16 %v1415, %v1415
    %v1936 = vpack.c.bf16 %v1430, %v1430
    %v1937 = vpack.c.bf16 %v1445, %v1445
    %v1938 = vpack.c.bf16 %v1460, %v1460
    %v1939 = vpack.c.bf16 %v1475, %v1475
    %v1942 = vunpack.c.l.b16 %v1924
    %v1943 = vunpack.c.l.b16 %v1925
    %v1944 = vpack.c.b16 %v1943, %v1942
    %1946 = vxpose.xlu0.c.b16.start [1/8] %v1944, 128
    %1947 = vxpose.xlu0.c.b16.cont [2/8] 0, 128
    %1948 = vxpose.xlu0.c.b16.cont [3/8] 0, 128
    %1949 = vxpose.xlu0.c.b16.cont [4/8] 0, 128
    %1950 = vxpose.xlu0.c.b16.cont [5/8] 0, 128
    %1951 = vxpose.xlu0.c.b16.cont [6/8] 0, 128
    %1952 = vxpose.xlu0.c.b16.cont [7/8] 0, 128
    %1953 = vxpose.xlu0.c.b16.end [8/8] 0, 128
    %v1954 = vpop.trf.xlu0
    %v1955 = vpop.trf.xlu0
    %v1956 = vpop.trf.xlu0
    %v1957 = vpop.trf.xlu0
    %v1958 = vpop.trf.xlu0
    %v1959 = vpop.trf.xlu0
    %v1960 = vpop.trf.xlu0
    %v1961 = vpop.trf.xlu0
    %v1964 = vsel %vm74, %v1954, 0
    %1966 = vmatpush.bf16.msra.mxu0 0
    %1967 = vmatpush.bf16.msra.mxu0 0
    %1968 = vmatpush.bf16.msra.mxu0 0
    %1969 = vmatpush.bf16.msra.mxu0 0
    %1970 = vmatpush.bf16.msra.mxu0 0
    %1971 = vmatpush.bf16.msra.mxu0 0
    %1972 = vmatpush.bf16.msra.mxu0 0
    %1973 = vmatpush.bf16.msra.mxu0 %v67
    %1974 = vmatmul.bf16.gmra.mxu0 %v1964
    %v1975 = vpop.f32.mrf.mxu0
    %v1976 = vadd.f32 0.0, %v1975
    %v1977 = vpop.f32.mrf.mxu0
    %1978 = vdwg.mxu0
    %v1981 = vunpack.c.l.b16 %v1926
    %v1982 = vunpack.c.l.b16 %v1927
    %v1983 = vpack.c.b16 %v1982, %v1981
    %1985 = vxpose.xlu0.c.b16.start [1/8] %v1983, 128
    %1986 = vxpose.xlu0.c.b16.cont [2/8] 0, 128
    %1987 = vxpose.xlu0.c.b16.cont [3/8] 0, 128
    %1988 = vxpose.xlu0.c.b16.cont [4/8] 0, 128
    %1989 = vxpose.xlu0.c.b16.cont [5/8] 0, 128
    %1990 = vxpose.xlu0.c.b16.cont [6/8] 0, 128
    %1991 = vxpose.xlu0.c.b16.cont [7/8] 0, 128
    %1992 = vxpose.xlu0.c.b16.end [8/8] 0, 128
    %v1993 = vpop.trf.xlu0
    %v1994 = vpop.trf.xlu0
    %v1995 = vpop.trf.xlu0
    %v1996 = vpop.trf.xlu0
    %v1997 = vpop.trf.xlu0
    %v1998 = vpop.trf.xlu0
    %v1999 = vpop.trf.xlu0
    %v2000 = vpop.trf.xlu0
    %v2003 = vsel %vm74, %v1993, 0
    %2005 = vmatpush.bf16.msra.mxu0 0
    %2006 = vmatpush.bf16.msra.mxu0 0
    %2007 = vmatpush.bf16.msra.mxu0 0
    %2008 = vmatpush.bf16.msra.mxu0 0
    %2009 = vmatpush.bf16.msra.mxu0 0
    %2010 = vmatpush.bf16.msra.mxu0 0
    %2011 = vmatpush.bf16.msra.mxu0 0
    %2012 = vmatpush.bf16.msra.mxu0 %v96
    %2013 = vmatmul.bf16.gmra.mxu0 %v2003
    %v2014 = vpop.f32.mrf.mxu0
    %v2015 = vadd.f32 0.0, %v2014
    %v2016 = vpop.f32.mrf.mxu0
    %2017 = vdwg.mxu0
    %v2020 = vunpack.c.l.b16 %v1928
    %v2021 = vunpack.c.l.b16 %v1929
    %v2022 = vpack.c.b16 %v2021, %v2020
    %2024 = vxpose.xlu0.c.b16.start [1/8] %v2022, 128
    %2025 = vxpose.xlu0.c.b16.cont [2/8] 0, 128
    %2026 = vxpose.xlu0.c.b16.cont [3/8] 0, 128
    %2027 = vxpose.xlu0.c.b16.cont [4/8] 0, 128
    %2028 = vxpose.xlu0.c.b16.cont [5/8] 0, 128
    %2029 = vxpose.xlu0.c.b16.cont [6/8] 0, 128
    %2030 = vxpose.xlu0.c.b16.cont [7/8] 0, 128
    %2031 = vxpose.xlu0.c.b16.end [8/8] 0, 128
    %v2032 = vpop.trf.xlu0
    %v2033 = vpop.trf.xlu0
    %v2034 = vpop.trf.xlu0
    %v2035 = vpop.trf.xlu0
    %v2036 = vpop.trf.xlu0
    %v2037 = vpop.trf.xlu0
    %v2038 = vpop.trf.xlu0
    %v2039 = vpop.trf.xlu0
    %v2042 = vsel %vm74, %v2032, 0
    %2044 = vmatpush.bf16.msra.mxu0 0
    %2045 = vmatpush.bf16.msra.mxu0 0
    %2046 = vmatpush.bf16.msra.mxu0 0
    %2047 = vmatpush.bf16.msra.mxu0 0
    %2048 = vmatpush.bf16.msra.mxu0 0
    %2049 = vmatpush.bf16.msra.mxu0 0
    %2050 = vmatpush.bf16.msra.mxu0 0
    %2051 = vmatpush.bf16.msra.mxu0 %v124
    %2052 = vmatmul.bf16.gmra.mxu0 %v2042
    %v2053 = vpop.f32.mrf.mxu0
    %v2054 = vadd.f32 0.0, %v2053
    %v2055 = vpop.f32.mrf.mxu0
    %2056 = vdwg.mxu0
    %v2059 = vunpack.c.l.b16 %v1930
    %v2060 = vunpack.c.l.b16 %v1931
    %v2061 = vpack.c.b16 %v2060, %v2059
    %2063 = vxpose.xlu0.c.b16.start [1/8] %v2061, 128
    %2064 = vxpose.xlu0.c.b16.cont [2/8] 0, 128
    %2065 = vxpose.xlu0.c.b16.cont [3/8] 0, 128
    %2066 = vxpose.xlu0.c.b16.cont [4/8] 0, 128
    %2067 = vxpose.xlu0.c.b16.cont [5/8] 0, 128
    %2068 = vxpose.xlu0.c.b16.cont [6/8] 0, 128
    %2069 = vxpose.xlu0.c.b16.cont [7/8] 0, 128
    %2070 = vxpose.xlu0.c.b16.end [8/8] 0, 128
    %v2071 = vpop.trf.xlu0
    %v2072 = vpop.trf.xlu0
    %v2073 = vpop.trf.xlu0
    %v2074 = vpop.trf.xlu0
    %v2075 = vpop.trf.xlu0
    %v2076 = vpop.trf.xlu0
    %v2077 = vpop.trf.xlu0
    %v2078 = vpop.trf.xlu0
    %v2081 = vsel %vm74, %v2071, 0
    %2083 = vmatpush.bf16.msra.mxu0 0
    %2084 = vmatpush.bf16.msra.mxu0 0
    %2085 = vmatpush.bf16.msra.mxu0 0
    %2086 = vmatpush.bf16.msra.mxu0 0
    %2087 = vmatpush.bf16.msra.mxu0 0
    %2088 = vmatpush.bf16.msra.mxu0 0
    %2089 = vmatpush.bf16.msra.mxu0 0
    %2090 = vmatpush.bf16.msra.mxu0 %v152
    %2091 = vmatmul.bf16.gmra.mxu0 %v2081
    %v2092 = vpop.f32.mrf.mxu0
    %v2093 = vadd.f32 0.0, %v2092
    %v2094 = vpop.f32.mrf.mxu0
    %2095 = vdwg.mxu0
    %v2098 = vunpack.c.l.b16 %v1932
    %v2099 = vunpack.c.l.b16 %v1933
    %v2100 = vpack.c.b16 %v2099, %v2098
    %2102 = vxpose.xlu0.c.b16.start [1/8] %v2100, 128
    %2103 = vxpose.xlu0.c.b16.cont [2/8] 0, 128
    %2104 = vxpose.xlu0.c.b16.cont [3/8] 0, 128
    %2105 = vxpose.xlu0.c.b16.cont [4/8] 0, 128
    %2106 = vxpose.xlu0.c.b16.cont [5/8] 0, 128
    %2107 = vxpose.xlu0.c.b16.cont [6/8] 0, 128
    %2108 = vxpose.xlu0.c.b16.cont [7/8] 0, 128
    %2109 = vxpose.xlu0.c.b16.end [8/8] 0, 128
    %v2110 = vpop.trf.xlu0
    %v2111 = vpop.trf.xlu0
    %v2112 = vpop.trf.xlu0
    %v2113 = vpop.trf.xlu0
    %v2114 = vpop.trf.xlu0
    %v2115 = vpop.trf.xlu0
    %v2116 = vpop.trf.xlu0
    %v2117 = vpop.trf.xlu0
    %v2120 = vsel %vm74, %v2110, 0
    %2122 = vmatpush.bf16.msra.mxu0 0
    %2123 = vmatpush.bf16.msra.mxu0 0
    %2124 = vmatpush.bf16.msra.mxu0 0
    %2125 = vmatpush.bf16.msra.mxu0 0
    %2126 = vmatpush.bf16.msra.mxu0 0
    %2127 = vmatpush.bf16.msra.mxu0 0
    %2128 = vmatpush.bf16.msra.mxu0 0
    %2129 = vmatpush.bf16.msra.mxu0 %v180
    %2130 = vmatmul.bf16.gmra.mxu0 %v2120
    %v2131 = vpop.f32.mrf.mxu0
    %v2132 = vadd.f32 0.0, %v2131
    %v2133 = vpop.f32.mrf.mxu0
    %2134 = vdwg.mxu0
    %v2137 = vunpack.c.l.b16 %v1934
    %v2138 = vunpack.c.l.b16 %v1935
    %v2139 = vpack.c.b16 %v2138, %v2137
    %2141 = vxpose.xlu0.c.b16.start [1/8] %v2139, 128
    %2142 = vxpose.xlu0.c.b16.cont [2/8] 0, 128
    %2143 = vxpose.xlu0.c.b16.cont [3/8] 0, 128
    %2144 = vxpose.xlu0.c.b16.cont [4/8] 0, 128
    %2145 = vxpose.xlu0.c.b16.cont [5/8] 0, 128
    %2146 = vxpose.xlu0.c.b16.cont [6/8] 0, 128
    %2147 = vxpose.xlu0.c.b16.cont [7/8] 0, 128
    %2148 = vxpose.xlu0.c.b16.end [8/8] 0, 128
    %v2149 = vpop.trf.xlu0
    %v2150 = vpop.trf.xlu0
    %v2151 = vpop.trf.xlu0
    %v2152 = vpop.trf.xlu0
    %v2153 = vpop.trf.xlu0
    %v2154 = vpop.trf.xlu0
    %v2155 = vpop.trf.xlu0
    %v2156 = vpop.trf.xlu0
    %v2159 = vsel %vm74, %v2149, 0
    %2161 = vmatpush.bf16.msra.mxu0 0
    %2162 = vmatpush.bf16.msra.mxu0 0
    %2163 = vmatpush.bf16.msra.mxu0 0
    %2164 = vmatpush.bf16.msra.mxu0 0
    %2165 = vmatpush.bf16.msra.mxu0 0
    %2166 = vmatpush.bf16.msra.mxu0 0
    %2167 = vmatpush.bf16.msra.mxu0 0
    %2168 = vmatpush.bf16.msra.mxu0 %v208
    %2169 = vmatmul.bf16.gmra.mxu0 %v2159
    %v2170 = vpop.f32.mrf.mxu0
    %v2171 = vadd.f32 0.0, %v2170
    %v2172 = vpop.f32.mrf.mxu0
    %2173 = vdwg.mxu0
    %v2176 = vunpack.c.l.b16 %v1936
    %v2177 = vunpack.c.l.b16 %v1937
    %v2178 = vpack.c.b16 %v2177, %v2176
    %2180 = vxpose.xlu0.c.b16.start [1/8] %v2178, 128
    %2181 = vxpose.xlu0.c.b16.cont [2/8] 0, 128
    %2182 = vxpose.xlu0.c.b16.cont [3/8] 0, 128
    %2183 = vxpose.xlu0.c.b16.cont [4/8] 0, 128
    %2184 = vxpose.xlu0.c.b16.cont [5/8] 0, 128
    %2185 = vxpose.xlu0.c.b16.cont [6/8] 0, 128
    %2186 = vxpose.xlu0.c.b16.cont [7/8] 0, 128
    %2187 = vxpose.xlu0.c.b16.end [8/8] 0, 128
    %v2188 = vpop.trf.xlu0
    %v2189 = vpop.trf.xlu0
    %v2190 = vpop.trf.xlu0
    %v2191 = vpop.trf.xlu0
    %v2192 = vpop.trf.xlu0
    %v2193 = vpop.trf.xlu0
    %v2194 = vpop.trf.xlu0
    %v2195 = vpop.trf.xlu0
    %v2198 = vsel %vm74, %v2188, 0
    %2200 = vmatpush.bf16.msra.mxu0 0
    %2201 = vmatpush.bf16.msra.mxu0 0
    %2202 = vmatpush.bf16.msra.mxu0 0
    %2203 = vmatpush.bf16.msra.mxu0 0
    %2204 = vmatpush.bf16.msra.mxu0 0
    %2205 = vmatpush.bf16.msra.mxu0 0
    %2206 = vmatpush.bf16.msra.mxu0 0
    %2207 = vmatpush.bf16.msra.mxu0 %v236
    %2208 = vmatmul.bf16.gmra.mxu0 %v2198
    %v2209 = vpop.f32.mrf.mxu0
    %v2210 = vadd.f32 0.0, %v2209
    %v2211 = vpop.f32.mrf.mxu0
    %2212 = vdwg.mxu0
    %v2215 = vunpack.c.l.b16 %v1938
    %v2216 = vunpack.c.l.b16 %v1939
    %v2217 = vpack.c.b16 %v2216, %v2215
    %2219 = vxpose.xlu0.c.b16.start [1/8] %v2217, 128
    %2220 = vxpose.xlu0.c.b16.cont [2/8] 0, 128
    %2221 = vxpose.xlu0.c.b16.cont [3/8] 0, 128
    %2222 = vxpose.xlu0.c.b16.cont [4/8] 0, 128
    %2223 = vxpose.xlu0.c.b16.cont [5/8] 0, 128
    %2224 = vxpose.xlu0.c.b16.cont [6/8] 0, 128
    %2225 = vxpose.xlu0.c.b16.cont [7/8] 0, 128
    %2226 = vxpose.xlu0.c.b16.end [8/8] 0, 128
    %v2227 = vpop.trf.xlu0
    %v2228 = vpop.trf.xlu0
    %v2229 = vpop.trf.xlu0
    %v2230 = vpop.trf.xlu0
    %v2231 = vpop.trf.xlu0
    %v2232 = vpop.trf.xlu0
    %v2233 = vpop.trf.xlu0
    %v2234 = vpop.trf.xlu0
    %v2237 = vsel %vm74, %v2227, 0
    %2239 = vmatpush.bf16.msra.mxu0 0
    %2240 = vmatpush.bf16.msra.mxu0 0
    %2241 = vmatpush.bf16.msra.mxu0 0
    %2242 = vmatpush.bf16.msra.mxu0 0
    %2243 = vmatpush.bf16.msra.mxu0 0
    %2244 = vmatpush.bf16.msra.mxu0 0
    %2245 = vmatpush.bf16.msra.mxu0 0
    %2246 = vmatpush.bf16.msra.mxu0 %v264
    %2247 = vmatmul.bf16.gmra.mxu0 %v2237
    %v2248 = vpop.f32.mrf.mxu0
    %v2249 = vadd.f32 0.0, %v2248
    %v2250 = vpop.f32.mrf.mxu0
    %2251 = vdwg.mxu0
    %v2253 = vsel %vm74, %v1976, 0
    %2255 = vmatpush.msra.mxu0 0.0
    %2256 = vmatpush.msra.mxu0 0.0
    %2257 = vmatpush.msra.mxu0 0.0
    %2258 = vmatpush.msra.mxu0 0.0
    %2259 = vmatpush.msra.mxu0 0.0
    %2260 = vmatpush.msra.mxu0 0.0
    %2261 = vmatpush.msra.mxu0 0.0
    %2262 = vmatpush.msra.mxu0 0.0
    %2263 = vmatpush.msra.mxu0 0.0
    %2264 = vmatpush.msra.mxu0 0.0
    %2265 = vmatpush.msra.mxu0 0.0
    %2266 = vmatpush.msra.mxu0 0.0
    %2267 = vmatpush.msra.mxu0 0.0
    %2268 = vmatpush.msra.mxu0 0.0
    %2269 = vmatpush.msra.mxu0 %v1265
    %2270 = vmatpush.msra.mxu0 %v1250
    %2271 = vmatmul.f32.gmra.mxu0 %v2253
    %v2272 = vpop.f32.mrf.mxu0
    %v2273 = vadd.f32 0.0, %v2272
    %2274 = vdwg.mxu0
    %v2276 = vsel %vm74, %v2015, 0
    %2278 = vmatpush.msra.mxu0 0.0
    %2279 = vmatpush.msra.mxu0 0.0
    %2280 = vmatpush.msra.mxu0 0.0
    %2281 = vmatpush.msra.mxu0 0.0
    %2282 = vmatpush.msra.mxu0 0.0
    %2283 = vmatpush.msra.mxu0 0.0
    %2284 = vmatpush.msra.mxu0 0.0
    %2285 = vmatpush.msra.mxu0 0.0
    %2286 = vmatpush.msra.mxu0 0.0
    %2287 = vmatpush.msra.mxu0 0.0
    %2288 = vmatpush.msra.mxu0 0.0
    %2289 = vmatpush.msra.mxu0 0.0
    %2290 = vmatpush.msra.mxu0 0.0
    %2291 = vmatpush.msra.mxu0 0.0
    %2292 = vmatpush.msra.mxu0 %v1295
    %2293 = vmatpush.msra.mxu0 %v1280
    %2294 = vmatmul.f32.gmra.mxu0 %v2276
    %v2295 = vpop.f32.mrf.mxu0
    %v2296 = vadd.f32 0.0, %v2295
    %2297 = vdwg.mxu0
    %v2299 = vsel %vm74, %v2054, 0
    %2301 = vmatpush.msra.mxu0 0.0
    %2302 = vmatpush.msra.mxu0 0.0
    %2303 = vmatpush.msra.mxu0 0.0
    %2304 = vmatpush.msra.mxu0 0.0
    %2305 = vmatpush.msra.mxu0 0.0
    %2306 = vmatpush.msra.mxu0 0.0
    %2307 = vmatpush.msra.mxu0 0.0
    %2308 = vmatpush.msra.mxu0 0.0
    %2309 = vmatpush.msra.mxu0 0.0
    %2310 = vmatpush.msra.mxu0 0.0
    %2311 = vmatpush.msra.mxu0 0.0
    %2312 = vmatpush.msra.mxu0 0.0
    %2313 = vmatpush.msra.mxu0 0.0
    %2314 = vmatpush.msra.mxu0 0.0
    %2315 = vmatpush.msra.mxu0 %v1325
    %2316 = vmatpush.msra.mxu0 %v1310
    %2317 = vmatmul.f32.gmra.mxu0 %v2299
    %v2318 = vpop.f32.mrf.mxu0
    %v2319 = vadd.f32 0.0, %v2318
    %2320 = vdwg.mxu0
    %v2322 = vsel %vm74, %v2093, 0
    %2324 = vmatpush.msra.mxu0 0.0
    %2325 = vmatpush.msra.mxu0 0.0
    %2326 = vmatpush.msra.mxu0 0.0
    %2327 = vmatpush.msra.mxu0 0.0
    %2328 = vmatpush.msra.mxu0 0.0
    %2329 = vmatpush.msra.mxu0 0.0
    %2330 = vmatpush.msra.mxu0 0.0
    %2331 = vmatpush.msra.mxu0 0.0
    %2332 = vmatpush.msra.mxu0 0.0
    %2333 = vmatpush.msra.mxu0 0.0
    %2334 = vmatpush.msra.mxu0 0.0
    %2335 = vmatpush.msra.mxu0 0.0
    %2336 = vmatpush.msra.mxu0 0.0
    %2337 = vmatpush.msra.mxu0 0.0
    %2338 = vmatpush.msra.mxu0 %v1355
    %2339 = vmatpush.msra.mxu0 %v1340
    %2340 = vmatmul.f32.gmra.mxu0 %v2322
    %v2341 = vpop.f32.mrf.mxu0
    %v2342 = vadd.f32 0.0, %v2341
    %2343 = vdwg.mxu0
    %v2345 = vsel %vm74, %v2132, 0
    %2347 = vmatpush.msra.mxu0 0.0
    %2348 = vmatpush.msra.mxu0 0.0
    %2349 = vmatpush.msra.mxu0 0.0
    %2350 = vmatpush.msra.mxu0 0.0
    %2351 = vmatpush.msra.mxu0 0.0
    %2352 = vmatpush.msra.mxu0 0.0
    %2353 = vmatpush.msra.mxu0 0.0
    %2354 = vmatpush.msra.mxu0 0.0
    %2355 = vmatpush.msra.mxu0 0.0
    %2356 = vmatpush.msra.mxu0 0.0
    %2357 = vmatpush.msra.mxu0 0.0
    %2358 = vmatpush.msra.mxu0 0.0
    %2359 = vmatpush.msra.mxu0 0.0
    %2360 = vmatpush.msra.mxu0 0.0
    %2361 = vmatpush.msra.mxu0 %v1385
    %2362 = vmatpush.msra.mxu0 %v1370
    %2363 = vmatmul.f32.gmra.mxu0 %v2345
    %v2364 = vpop.f32.mrf.mxu0
    %v2365 = vadd.f32 0.0, %v2364
    %2366 = vdwg.mxu0
    %v2368 = vsel %vm74, %v2171, 0
    %2370 = vmatpush.msra.mxu0 0.0
    %2371 = vmatpush.msra.mxu0 0.0
    %2372 = vmatpush.msra.mxu0 0.0
    %2373 = vmatpush.msra.mxu0 0.0
    %2374 = vmatpush.msra.mxu0 0.0
    %2375 = vmatpush.msra.mxu0 0.0
    %2376 = vmatpush.msra.mxu0 0.0
    %2377 = vmatpush.msra.mxu0 0.0
    %2378 = vmatpush.msra.mxu0 0.0
    %2379 = vmatpush.msra.mxu0 0.0
    %2380 = vmatpush.msra.mxu0 0.0
    %2381 = vmatpush.msra.mxu0 0.0
    %2382 = vmatpush.msra.mxu0 0.0
    %2383 = vmatpush.msra.mxu0 0.0
    %2384 = vmatpush.msra.mxu0 %v1415
    %2385 = vmatpush.msra.mxu0 %v1400
    %2386 = vmatmul.f32.gmra.mxu0 %v2368
    %v2387 = vpop.f32.mrf.mxu0
    %v2388 = vadd.f32 0.0, %v2387
    %2389 = vdwg.mxu0
    %v2391 = vsel %vm74, %v2210, 0
    %2393 = vmatpush.msra.mxu0 0.0
    %2394 = vmatpush.msra.mxu0 0.0
    %2395 = vmatpush.msra.mxu0 0.0
    %2396 = vmatpush.msra.mxu0 0.0
    %2397 = vmatpush.msra.mxu0 0.0
    %2398 = vmatpush.msra.mxu0 0.0
    %2399 = vmatpush.msra.mxu0 0.0
    %2400 = vmatpush.msra.mxu0 0.0
    %2401 = vmatpush.msra.mxu0 0.0
    %2402 = vmatpush.msra.mxu0 0.0
    %2403 = vmatpush.msra.mxu0 0.0
    %2404 = vmatpush.msra.mxu0 0.0
    %2405 = vmatpush.msra.mxu0 0.0
    %2406 = vmatpush.msra.mxu0 0.0
    %2407 = vmatpush.msra.mxu0 %v1445
    %2408 = vmatpush.msra.mxu0 %v1430
    %2409 = vmatmul.f32.gmra.mxu0 %v2391
    %v2410 = vpop.f32.mrf.mxu0
    %v2411 = vadd.f32 0.0, %v2410
    %2412 = vdwg.mxu0
    %v2414 = vsel %vm74, %v2249, 0
    %2416 = vmatpush.msra.mxu0 0.0
    %2417 = vmatpush.msra.mxu0 0.0
    %2418 = vmatpush.msra.mxu0 0.0
    %2419 = vmatpush.msra.mxu0 0.0
    %2420 = vmatpush.msra.mxu0 0.0
    %2421 = vmatpush.msra.mxu0 0.0
    %2422 = vmatpush.msra.mxu0 0.0
    %2423 = vmatpush.msra.mxu0 0.0
    %2424 = vmatpush.msra.mxu0 0.0
    %2425 = vmatpush.msra.mxu0 0.0
    %2426 = vmatpush.msra.mxu0 0.0
    %2427 = vmatpush.msra.mxu0 0.0
    %2428 = vmatpush.msra.mxu0 0.0
    %2429 = vmatpush.msra.mxu0 0.0
    %2430 = vmatpush.msra.mxu0 %v1475
    %2431 = vmatpush.msra.mxu0 %v1460
    %2432 = vmatmul.f32.gmra.mxu0 %v2414
    %v2433 = vpop.f32.mrf.mxu0
    %v2434 = vadd.f32 0.0, %v2433
    %2435 = vdwg.mxu0
    %v2436 = vld [vmem:[%s6] sm:$0xff]
    %v2438 = vsel %vm771, %v2273, 0
    %v2441 = vsel %vm771, %v2296, 0
    %v2444 = vsel %vm771, %v2319, 0
    %v2447 = vsel %vm771, %v2342, 0
    %v2450 = vsel %vm771, %v2365, 0
    %v2453 = vsel %vm771, %v2388, 0
    %v2456 = vsel %vm771, %v2411, 0
    %v2459 = vsel %vm771, %v2434, 0
    %2461 = vmatpush.msra.mxu0 0.0
    %2462 = vmatpush.msra.mxu0 0.0
    %2463 = vmatpush.msra.mxu0 0.0
    %2464 = vmatpush.msra.mxu0 0.0
    %2465 = vmatpush.msra.mxu0 0.0
    %2466 = vmatpush.msra.mxu0 0.0
    %2467 = vmatpush.msra.mxu0 0.0
    %2468 = vmatpush.msra.mxu0 0.0
    %2469 = vmatpush.msra.mxu0 0.0
    %2470 = vmatpush.msra.mxu0 0.0
    %2471 = vmatpush.msra.mxu0 0.0
    %2472 = vmatpush.msra.mxu0 0.0
    %2473 = vmatpush.msra.mxu0 0.0
    %2474 = vmatpush.msra.mxu0 0.0
    %2475 = vmatpush.msra.mxu0 0.0
    %2476 = vmatpush.msra.mxu0 %v2436
    %2477 = vmatmul.f32.gmra.mxu0 %v2438
    %v2478 = vpop.f32.mrf.mxu0
    %v2479 = vadd.f32 0.0, %v2478
    %2480 = vmatmul.f32.gmra.mxu0 %v2441
    %v2481 = vpop.f32.mrf.mxu0
    %v2482 = vadd.f32 0.0, %v2481
    %2483 = vmatmul.f32.gmra.mxu0 %v2444
    %v2484 = vpop.f32.mrf.mxu0
    %v2485 = vadd.f32 0.0, %v2484
    %2486 = vmatmul.f32.gmra.mxu0 %v2447
    %v2487 = vpop.f32.mrf.mxu0
    %v2488 = vadd.f32 0.0, %v2487
    %2489 = vmatmul.f32.gmra.mxu0 %v2450
    %v2490 = vpop.f32.mrf.mxu0
    %v2491 = vadd.f32 0.0, %v2490
    %2492 = vmatmul.f32.gmra.mxu0 %v2453
    %v2493 = vpop.f32.mrf.mxu0
    %v2494 = vadd.f32 0.0, %v2493
    %2495 = vmatmul.f32.gmra.mxu0 %v2456
    %v2496 = vpop.f32.mrf.mxu0
    %v2497 = vadd.f32 0.0, %v2496
    %2498 = vmatmul.f32.gmra.mxu0 %v2459
    %v2499 = vpop.f32.mrf.mxu0
    %v2500 = vadd.f32 0.0, %v2499
    %2501 = vdwg.mxu0
    %2502 = vst [vmem:[#allocation4] sm:$0xff] %v2479
    %2503 = vst [vmem:[#allocation4 + $0x8] sm:$0xff] %v2482
    %2504 = vst [vmem:[#allocation4 + $0x10] sm:$0xff] %v2485
    %2505 = vst [vmem:[#allocation4 + $0x18] sm:$0xff] %v2488
    %2506 = vst [vmem:[#allocation4 + $0x20] sm:$0xff] %v2491
    %2507 = vst [vmem:[#allocation4 + $0x28] sm:$0xff] %v2494
    %2508 = vst [vmem:[#allocation4 + $0x30] sm:$0xff] %v2497
    %2509 = vst [vmem:[#allocation4 + $0x38] sm:$0xff] %v2500
    // Predicated region
    $region30: #{tpu_custom_call.1} parent=1 // pred_check
      _
    $region31: #{tpu_custom_call.1} parent=1 // pred_check_branch
      %2511 = sbr.rel (0) target = $region33
    $region32: #{tpu_custom_call.1} parent=1 // pred_region
      %2513 = vsyncadd [#allocation3], 0
      %s2514 = sshll.u32 [#allocation2], 4
      %s2515 = int_to_ptr.vmem [resolvable:$true] %s2514
      %s2516 = sshll.u32 %s7, 4
      %s2517 = int_to_ptr.hbm [resolvable:$true] %s2516
      %2522 = dma.vmem_to_hbm [thread:$0]  %s2515, 1024, %s2517, [#allocation3], 128, 128, 8
    $region33: #{tpu_custom_call.1} parent=1 // pred_fallthru
      _
    // Predicated region
    $region34: #{tpu_custom_call.1} parent=1 // pred_check
      _
    $region35: #{tpu_custom_call.1} parent=1 // pred_check_branch
      %2524 = sbr.rel (0) target = $region37
    $region36: #{tpu_custom_call.1} parent=1 // pred_region
      %2526 = vsyncadd [#allocation5], 0
      %s2527 = sshll.u32 [#allocation4], 4
      %s2528 = int_to_ptr.vmem [resolvable:$true] %s2527
      %s2529 = sshll.u32 %s8, 4
      %s2530 = int_to_ptr.hbm [resolvable:$true] %s2529
      %2535 = dma.vmem_to_hbm [thread:$0]  %s2528, 1024, %s2530, [#allocation5], 128, 128, 8
    $region37: #{tpu_custom_call.1} parent=1 // pred_fallthru
      _
    // Predicated region
    $region38: #{tpu_custom_call.1} parent=1 // pred_check
      _
    $region39: #{tpu_custom_call.1} parent=1 // pred_check_branch
      %2537 = sbr.rel (0) target = $region41
    $region40: #{tpu_custom_call.1} parent=1 // pred_region
      %2539 = dma.done [#allocation3], 1024
    $region41: #{tpu_custom_call.1} parent=1 // pred_fallthru
      _
    // Predicated region
    $region42: #{tpu_custom_call.1} parent=1 // pred_check
      _
    $region43: #{tpu_custom_call.1} parent=1 // pred_check_branch
      %2541 = sbr.rel (0) target = $region45
    $region44: #{tpu_custom_call.1} parent=1 // pred_region
      %2543 = dma.done [#allocation5], 1024
    $region45: #{tpu_custom_call.1} parent=1 // pred_fallthru
      _
    %2544 = vsyncpa [#allocation3], 1
    %2545 = vsyncpa [#allocation5], 1

</llo_original>
